<compile_context>
chip_gen: v7x
topology: tpu7x:2x2x1
jax: 0.10.0
libtpu: 0.0.40
codegen_flags: <defaults>
</compile_context>

<pallas_src>
import functools

import numpy as np
import jax
import jax.numpy as jnp
from jax import lax
from jax.experimental import pallas as pl
from jax.experimental.pallas import tpu as pltpu

EPS = 1e-5


# ----------------------------- in-kernel helpers -----------------------------

def _bn_relu(ys, gamma, beta, inv_m, *, relu):
    """Training-mode BN over a list of per-image (C, HW) slabs (global stats).

    Single-pass sum + sum-of-squares (stats stay in f32), rsqrt on the EUP
    slot, then one folded per-channel FMA pass per slab.
    """
    s = jnp.sum(ys[0], axis=1, keepdims=True)
    ss = jnp.sum(ys[0] * ys[0], axis=1, keepdims=True)
    for y in ys[1:]:
        s = s + jnp.sum(y, axis=1, keepdims=True)
        ss = ss + jnp.sum(y * y, axis=1, keepdims=True)
    mean = s * inv_m
    var = ss * inv_m - mean * mean
    scale = gamma * lax.rsqrt(var + EPS)
    bias = beta - mean * scale
    outs = [y * scale + bias for y in ys]
    if relu:
        outs = [jnp.maximum(o, 0.0) for o in outs]
    return outs


# --------------------------------- kernel ------------------------------------

def bottleneck_kernel(x_ref, w1_ref, w2_ref, w3_ref, bn_ref, mask_ref, out_ref,
                      *, N, H, W, matmul_dtype):
    """Fused Bottleneck forward, channel-major / pixel-on-lanes layout.

    x_ref   : (N, Cin, HW)   HW = H*W pixels on lanes (lane-dense)
    w1_ref  : (P, Cin)        conv1 1x1, (out, in)
    w2_ref  : (9, P, P)       conv2 3x3 taps, each (out, in); tap k = ky*3 + kx
    w3_ref  : (Cout, P)       conv3 1x1, (out, in)
    bn_ref  : (Cout, 6)       packed per-channel BN params: g1,b1,g2,b2,g3,b3
    mask_ref: (9, HW)         per-tap zero-padding validity masks (0/1, f32)
    out_ref : (N, Cout, HW)
    """
    HW = H * W
    P = w1_ref.shape[0]
    inv_m = 1.0 / (N * HW)
    md = matmul_dtype

    # Small operands: load once, hoisted out of all loops.
    w1 = w1_ref[...].astype(md)        # (P, Cin)
    w2 = w2_ref[...].astype(md)        # (9, P, P)
    w3 = w3_ref[...].astype(md)        # (Cout, P)
    masks = mask_ref[...]              # (9, HW), 0/1 f32

    # ---- stage 1: conv1 (1x1) + bn1 + relu (per image, global BN stats) ----
    y1 = [jnp.dot(w1, x_ref[n].astype(md), preferred_element_type=jnp.float32)
          for n in range(N)]
    h1 = _bn_relu(y1, bn_ref[0:P, 0:1], bn_ref[0:P, 1:2], inv_m, relu=True)

    # ---- stage 2: conv2 (3x3, pad=1) as 9 shifted matmul accumulations -----
    # Pixel index m = y*W + x within an image; tap (dy,dx) reads source lane
    # m + dy*W + dx, brought to lane m by a lane roll; out-of-image sources are
    # zeroed by the precomputed masks (reproduces the conv's zero padding).
    taps = ((-1, -1), (-1, 0), (-1, 1),
            (0, -1), (0, 0), (0, 1),
            (1, -1), (1, 0), (1, 1))

    def conv3x3(h):                    # h: (P, HW), f32
        # seed from the center tap (no zero slab, no mask, no roll)
        acc = jnp.dot(w2[4], h.astype(md), preferred_element_type=jnp.float32)
        for k, (dy, dx) in enumerate(taps):
            if dy == 0 and dx == 0:
                continue
            off = dy * W + dx
            shifted = pltpu.roll(h, (-off) % HW, axis=1) * masks[k:k + 1, :]
            acc = acc + jnp.dot(w2[k], shifted.astype(md),
                                preferred_element_type=jnp.float32)
        return acc

    y2 = [conv3x3(h1[n]) for n in range(N)]
    h2 = _bn_relu(y2, bn_ref[0:P, 2:3], bn_ref[0:P, 3:4], inv_m, relu=True)

    # ---- stage 3: conv3 (1x1) + bn3 + residual add + relu ----
    y3 = [jnp.dot(w3, h2[n].astype(md), preferred_element_type=jnp.float32)
          for n in range(N)]
    h3 = _bn_relu(y3, bn_ref[:, 4:5], bn_ref[:, 5:6], inv_m, relu=False)

    for n in range(N):
        # Residual re-reads x_ref[n] here (VMEM-resident window) instead of
        # keeping a stage-1 load live across the whole kernel.
        out_ref[n] = jnp.maximum(h3[n] + x_ref[n], 0.0)   # lane-dense vst


# --------------------------------- wrapper -----------------------------------

def _full_spec(shape):
    # Single grid step; block == whole array (satisfies the "full dim" rule).
    return pl.BlockSpec(shape, lambda i: tuple(0 for _ in shape))


def bottleneck_forward(x_nchw, params, *, matmul_dtype=jnp.float32):
    w1, g1, b1, w2, g2, b2, w3, g3, b3 = params
    N, Cin, H, W = x_nchw.shape
    P = w1.shape[1]
    Cout = w3.shape[1]
    HW = H * W
    M = N * HW

    assert Cin == Cout, "downsample=None path requires Cin == Cout"
    assert HW % 128 == 0, "pixel axis must be a multiple of 128 (lane-dense stores)"
    assert Cin % 8 == 0 and Cout % 8 == 0, "channel axes should be sublane-aligned"

    # NCHW -> (N, Cin, H*W): contiguous trailing-dim merge (bitcast, no HBM
    # round-trip) — replaces the previous full activation transpose.
    x3 = x_nchw.reshape(N, Cin, HW)

    # ---- tiny weight / BN-param packing (negligible vs. activation traffic) ----
    w1T = w1.T                                                   # (P, Cin)
    w2T = jnp.transpose(w2, (0, 1, 3, 2)).reshape(9, P, P)       # (tap, out, in)
    w3T = w3.T                                                   # (Cout, P)

    def _col(v):                                                 # (1,C) -> (Cout,1)
        v = v.reshape(-1)
        return jnp.pad(v, (0, Cout - v.shape[0])).reshape(Cout, 1)

    bn = jnp.concatenate([_col(g1), _col(b1), _col(g2), _col(b2),
                          _col(g3), _col(b3)], axis=1)           # (Cout, 6)

    # Per-tap zero-padding validity masks, precomputed on the host (hoisted out
    # of the kernel's 9-tap loop; no in-kernel integer div/mod).
    lane = np.arange(HW)
    px, py = lane % W, lane // W
    rows = []
    for dy in (-1, 0, 1):
        for dx in (-1, 0, 1):
            rows.append(((px + dx >= 0) & (px + dx < W) &
                         (py + dy >= 0) & (py + dy < H)).astype(np.float32))
    masks = jnp.asarray(np.stack(rows))                          # (9, HW)

    kernel = functools.partial(bottleneck_kernel, N=N, H=H, W=W,
                               matmul_dtype=matmul_dtype)

    flops = 2 * M * (Cin * P + 9 * P * P + P * Cout)
    bytes_accessed = 4 * (Cin * M + Cout * M + P * Cin + 9 * P * P
                          + Cout * P + Cout * 6 + 9 * HW)
    cost = pl.CostEstimate(flops=flops, transcendentals=3 * Cout,
                           bytes_accessed=bytes_accessed)

    out3 = pl.pallas_call(
        kernel,
        out_shape=jax.ShapeDtypeStruct((N, Cout, HW), jnp.float32),
        grid=(1,),
        in_specs=[_full_spec((N, Cin, HW)),
                  _full_spec((P, Cin)),
                  _full_spec((9, P, P)),
                  _full_spec((Cout, P)),
                  _full_spec((Cout, 6)),
                  _full_spec((9, HW))],
        out_specs=_full_spec((N, Cout, HW)),
        compiler_params=pltpu.CompilerParams(
            dimension_semantics=("arbitrary",),
            vmem_limit_bytes=32 * 1024 * 1024),
        cost_estimate=cost,
    )(x3, w1T, w2T, w3T, bn, masks)

    # (N, Cout, H*W) -> NCHW: trailing-dim split (bitcast).
    return out3.reshape(N, Cout, H, W)


# ------------------------------ pure-JAX reference ----------------------------

def _ref_bn(y_nhwc, gamma, beta):
    mean = jnp.mean(y_nhwc, axis=(0, 1, 2), keepdims=True)
    var = jnp.mean(jnp.square(y_nhwc - mean), axis=(0, 1, 2), keepdims=True)
    return (y_nhwc - mean) * (gamma.reshape(1, 1, 1, -1) * lax.rsqrt(var + EPS)) \
        + beta.reshape(1, 1, 1, -1)


def bottleneck_ref(x_nchw, params):
    w1, g1, b1, w2, g2, b2, w3, g3, b3 = params
    x = jnp.transpose(x_nchw, (0, 2, 3, 1))
    dn = ('NHWC', 'HWIO', 'NHWC')
    Cin, P = w1.shape
    Cout = w3.shape[1]
    h1 = lax.conv_general_dilated(x, w1.reshape(1, 1, Cin, P), (1, 1), 'VALID',
                                  dimension_numbers=dn)
    h1 = jnp.maximum(_ref_bn(h1, g1, b1), 0.0)
    h2 = lax.conv_general_dilated(h1, w2, (1, 1), 'SAME', dimension_numbers=dn)
    h2 = jnp.maximum(_ref_bn(h2, g2, b2), 0.0)
    h3 = lax.conv_general_dilated(h2, w3.reshape(1, 1, P, Cout), (1, 1), 'VALID',
                                  dimension_numbers=dn)
    h3 = _ref_bn(h3, g3, b3)
    out = jnp.maximum(h3 + x, 0.0)
    return jnp.transpose(out, (0, 3, 1, 2))


# ----------------------------------- main -------------------------------------

if __name__ == "__main__":
    # Bottleneck(inplanes=16, planes=4) -> output channels = planes*4 = 16
    N, H, W = 2, 16, 16
    inplanes, planes = 16, 4
    cout = planes * 4

    key = jax.random.PRNGKey(0)
    ks = jax.random.split(key, 10)
    x = jax.random.normal(ks[0], (N, inplanes, H, W), jnp.float32)

    w1 = 0.1 * jax.random.normal(ks[1], (inplanes, planes), jnp.float32)      # 1x1
    w2 = 0.1 * jax.random.normal(ks[2], (3, 3, planes, planes), jnp.float32)  # 3x3 HWIO
    w3 = 0.1 * jax.random.normal(ks[3], (planes, cout), jnp.float32)          # 1x1
    g1 = 1.0 + 0.1 * jax.random.normal(ks[4], (1, planes), jnp.float32)
    b1 = 0.1 * jax.random.normal(ks[5], (1, planes), jnp.float32)
    g2 = 1.0 + 0.1 * jax.random.normal(ks[6], (1, planes), jnp.float32)
    b2 = 0.1 * jax.random.normal(ks[7], (1, planes), jnp.float32)
    g3 = 1.0 + 0.1 * jax.random.normal(ks[8], (1, cout), jnp.float32)
    b3 = 0.1 * jax.random.normal(ks[9], (1, cout), jnp.float32)

    params = (w1, g1, b1, w2, g2, b2, w3, g3, b3)

    out = bottleneck_forward(x, params)
    out = jax.block_until_ready(out)

    ref = jax.block_until_ready(bottleneck_ref(x, params))
    assert out.shape == (N, cout, H, W), out.shape
    max_err = float(jnp.max(jnp.abs(out - ref)))
    assert max_err < 1e-3, f"mismatch vs reference: max abs err {max_err}"

    print("KERNEL_OK")
</pallas_src>

<mosaic_0001>
module attributes {stable_mosaic.version = 11 : i64} {
  func.func @bottleneck_kernel(%arg0: i32, %arg1: memref<2x16x256xf32, #tpu.memory_space<vmem>>, %arg2: memref<4x16xf32, #tpu.memory_space<vmem>>, %arg3: memref<9x4x4xf32, #tpu.memory_space<vmem>>, %arg4: memref<16x4xf32, #tpu.memory_space<vmem>>, %arg5: memref<16x6xf32, #tpu.memory_space<vmem>>, %arg6: memref<9x256xf32, #tpu.memory_space<vmem>>, %arg7: memref<2x16x256xf32, #tpu.memory_space<vmem>>) attributes {dimension_semantics = [#tpu.dimension_semantics<arbitrary>], iteration_bounds = array<i64: 1>, scalar_prefetch = 0 : i64, scratch_operands = 0 : i64, tpu.core_type = #tpu.core_type<tc>, window_params = [{pipeline_mode = #tpu.pipeline_mode<synchronous>, transform_indices = @transform_0, window_bounds = array<i64: 2, 16, 256>}, {pipeline_mode = #tpu.pipeline_mode<synchronous>, transform_indices = @transform_1, window_bounds = array<i64: 4, 16>}, {pipeline_mode = #tpu.pipeline_mode<synchronous>, transform_indices = @transform_2, window_bounds = array<i64: 9, 4, 4>}, {pipeline_mode = #tpu.pipeline_mode<synchronous>, transform_indices = @transform_3, window_bounds = array<i64: 16, 4>}, {pipeline_mode = #tpu.pipeline_mode<synchronous>, transform_indices = @transform_4, window_bounds = array<i64: 16, 6>}, {pipeline_mode = #tpu.pipeline_mode<synchronous>, transform_indices = @transform_5, window_bounds = array<i64: 9, 256>}, {pipeline_mode = #tpu.pipeline_mode<synchronous>, transform_indices = @transform_6, window_bounds = array<i64: 2, 16, 256>}]} {
    %c0 = arith.constant 0 : index
    %c0_0 = arith.constant 0 : index
    %0 = vector.load %arg2[%c0, %c0_0] : memref<4x16xf32, #tpu.memory_space<vmem>>, vector<4x16xf32>
    %c0_1 = arith.constant 0 : index
    %c0_2 = arith.constant 0 : index
    %c0_3 = arith.constant 0 : index
    %1 = vector.load %arg3[%c0_1, %c0_2, %c0_3] : memref<9x4x4xf32, #tpu.memory_space<vmem>>, vector<9x4x4xf32>
    %c0_4 = arith.constant 0 : index
    %c0_5 = arith.constant 0 : index
    %2 = vector.load %arg4[%c0_4, %c0_5] : memref<16x4xf32, #tpu.memory_space<vmem>>, vector<16x4xf32>
    %c0_6 = arith.constant 0 : index
    %c0_7 = arith.constant 0 : index
    %3 = vector.load %arg6[%c0_6, %c0_7] : memref<9x256xf32, #tpu.memory_space<vmem>>, vector<9x256xf32>
    %c0_8 = arith.constant 0 : index
    %c0_9 = arith.constant 0 : index
    %c0_10 = arith.constant 0 : index
    %4 = vector.load %arg1[%c0_8, %c0_9, %c0_10] : memref<2x16x256xf32, #tpu.memory_space<vmem>>, vector<1x16x256xf32>
    %5 = vector.shape_cast %4 : vector<1x16x256xf32> to vector<16x256xf32>
    %cst = arith.constant dense<0.000000e+00> : vector<4x256xf32>
    %6 = tpu.matmul %0, %5, %cst {dimension_numbers = #tpu.dot_dimension_numbers<[1], [0], [0], [1], [0, 0, 1, 1], [], []>} : vector<4x16xf32>, vector<16x256xf32>, vector<4x256xf32> -> vector<4x256xf32>
    %c1 = arith.constant 1 : index
    %c0_11 = arith.constant 0 : index
    %c0_12 = arith.constant 0 : index
    %7 = vector.load %arg1[%c1, %c0_11, %c0_12] : memref<2x16x256xf32, #tpu.memory_space<vmem>>, vector<1x16x256xf32>
    %8 = vector.shape_cast %7 : vector<1x16x256xf32> to vector<16x256xf32>
    %cst_13 = arith.constant dense<0.000000e+00> : vector<4x256xf32>
    %9 = tpu.matmul %0, %8, %cst_13 {dimension_numbers = #tpu.dot_dimension_numbers<[1], [0], [0], [1], [0, 0, 1, 1], [], []>} : vector<4x16xf32>, vector<16x256xf32>, vector<4x256xf32> -> vector<4x256xf32>
    %c0_14 = arith.constant 0 : index
    %c0_15 = arith.constant 0 : index
    %10 = vector.load %arg5[%c0_14, %c0_15] : memref<16x6xf32, #tpu.memory_space<vmem>>, vector<4x1xf32>
    %c0_16 = arith.constant 0 : index
    %c1_17 = arith.constant 1 : index
    %11 = vector.load %arg5[%c0_16, %c1_17] : memref<16x6xf32, #tpu.memory_space<vmem>>, vector<4x1xf32>
    %cst_18 = arith.constant dense<0.000000e+00> : vector<4xf32>
    %12 = vector.multi_reduction <add>, %6, %cst_18 [1] : vector<4x256xf32> to vector<4xf32>
    %13 = vector.shape_cast %12 : vector<4xf32> to vector<4x1xf32>
    %14 = arith.mulf %6, %6 : vector<4x256xf32>
    %cst_19 = arith.constant dense<0.000000e+00> : vector<4xf32>
    %15 = vector.multi_reduction <add>, %14, %cst_19 [1] : vector<4x256xf32> to vector<4xf32>
    %16 = vector.shape_cast %15 : vector<4xf32> to vector<4x1xf32>
    %cst_20 = arith.constant dense<0.000000e+00> : vector<4xf32>
    %17 = vector.multi_reduction <add>, %9, %cst_20 [1] : vector<4x256xf32> to vector<4xf32>
    %18 = vector.shape_cast %17 : vector<4xf32> to vector<4x1xf32>
    %19 = arith.addf %13, %18 : vector<4x1xf32>
    %20 = arith.mulf %9, %9 : vector<4x256xf32>
    %cst_21 = arith.constant dense<0.000000e+00> : vector<4xf32>
    %21 = vector.multi_reduction <add>, %20, %cst_21 [1] : vector<4x256xf32> to vector<4xf32>
    %22 = vector.shape_cast %21 : vector<4xf32> to vector<4x1xf32>
    %23 = arith.addf %16, %22 : vector<4x1xf32>
    %cst_22 = arith.constant 0.001953125 : f32
    %24 = vector.broadcast %cst_22 : f32 to vector<4x1xf32>
    %25 = arith.mulf %19, %24 : vector<4x1xf32>
    %cst_23 = arith.constant 0.001953125 : f32
    %26 = vector.broadcast %cst_23 : f32 to vector<4x1xf32>
    %27 = arith.mulf %23, %26 : vector<4x1xf32>
    %28 = arith.mulf %25, %25 : vector<4x1xf32>
    %29 = arith.subf %27, %28 : vector<4x1xf32>
    %cst_24 = arith.constant 9.99999974E-6 : f32
    %30 = vector.broadcast %cst_24 : f32 to vector<4x1xf32>
    %31 = arith.addf %29, %30 : vector<4x1xf32>
    %32 = math.rsqrt %31 : vector<4x1xf32>
    %33 = arith.mulf %10, %32 : vector<4x1xf32>
    %34 = arith.mulf %25, %33 : vector<4x1xf32>
    %35 = arith.subf %11, %34 : vector<4x1xf32>
    %36 = vector.broadcast %33 : vector<4x1xf32> to vector<4x256xf32>
    %37 = arith.mulf %6, %36 : vector<4x256xf32>
    %38 = vector.broadcast %35 : vector<4x1xf32> to vector<4x256xf32>
    %39 = arith.addf %37, %38 : vector<4x256xf32>
    %40 = vector.broadcast %33 : vector<4x1xf32> to vector<4x256xf32>
    %41 = arith.mulf %9, %40 : vector<4x256xf32>
    %42 = vector.broadcast %35 : vector<4x1xf32> to vector<4x256xf32>
    %43 = arith.addf %41, %42 : vector<4x256xf32>
    %cst_25 = arith.constant 0.000000e+00 : f32
    %44 = vector.broadcast %cst_25 : f32 to vector<4x256xf32>
    %45 = arith.maximumf %39, %44 : vector<4x256xf32>
    %cst_26 = arith.constant 0.000000e+00 : f32
    %46 = vector.broadcast %cst_26 : f32 to vector<4x256xf32>
    %47 = arith.maximumf %43, %46 : vector<4x256xf32>
    %48 = vector.extract_strided_slice %1 {offsets = [4, 0, 0], sizes = [1, 4, 4], strides = [1, 1, 1]} : vector<9x4x4xf32> to vector<1x4x4xf32>
    %49 = vector.shape_cast %48 : vector<1x4x4xf32> to vector<4x4xf32>
    %cst_27 = arith.constant dense<0.000000e+00> : vector<4x256xf32>
    %50 = tpu.matmul %49, %45, %cst_27 {dimension_numbers = #tpu.dot_dimension_numbers<[1], [0], [0], [1], [0, 0, 1, 1], [], []>} : vector<4x4xf32>, vector<4x256xf32>, vector<4x256xf32> -> vector<4x256xf32>
    %c17_i32 = arith.constant 17 : i32
    %51 = tpu.dynamic_rotate %45 by %c17_i32 dim 1 : vector<4x256xf32>, i32 -> vector<4x256xf32>
    %52 = vector.extract_strided_slice %3 {offsets = [0, 0], sizes = [1, 256], strides = [1, 1]} : vector<9x256xf32> to vector<1x256xf32>
    %53 = vector.broadcast %52 : vector<1x256xf32> to vector<4x256xf32>
    %54 = arith.mulf %51, %53 : vector<4x256xf32>
    %55 = vector.extract_strided_slice %1 {offsets = [0, 0, 0], sizes = [1, 4, 4], strides = [1, 1, 1]} : vector<9x4x4xf32> to vector<1x4x4xf32>
    %56 = vector.shape_cast %55 : vector<1x4x4xf32> to vector<4x4xf32>
    %cst_28 = arith.constant dense<0.000000e+00> : vector<4x256xf32>
    %57 = tpu.matmul %56, %54, %cst_28 {dimension_numbers = #tpu.dot_dimension_numbers<[1], [0], [0], [1], [0, 0, 1, 1], [], []>} : vector<4x4xf32>, vector<4x256xf32>, vector<4x256xf32> -> vector<4x256xf32>
    %58 = arith.addf %50, %57 : vector<4x256xf32>
    %c16_i32 = arith.constant 16 : i32
    %59 = tpu.dynamic_rotate %45 by %c16_i32 dim 1 : vector<4x256xf32>, i32 -> vector<4x256xf32>
    %60 = vector.extract_strided_slice %3 {offsets = [1, 0], sizes = [1, 256], strides = [1, 1]} : vector<9x256xf32> to vector<1x256xf32>
    %61 = vector.broadcast %60 : vector<1x256xf32> to vector<4x256xf32>
    %62 = arith.mulf %59, %61 : vector<4x256xf32>
    %63 = vector.extract_strided_slice %1 {offsets = [1, 0, 0], sizes = [1, 4, 4], strides = [1, 1, 1]} : vector<9x4x4xf32> to vector<1x4x4xf32>
    %64 = vector.shape_cast %63 : vector<1x4x4xf32> to vector<4x4xf32>
    %cst_29 = arith.constant dense<0.000000e+00> : vector<4x256xf32>
    %65 = tpu.matmul %64, %62, %cst_29 {dimension_numbers = #tpu.dot_dimension_numbers<[1], [0], [0], [1], [0, 0, 1, 1], [], []>} : vector<4x4xf32>, vector<4x256xf32>, vector<4x256xf32> -> vector<4x256xf32>
    %66 = arith.addf %58, %65 : vector<4x256xf32>
    %c15_i32 = arith.constant 15 : i32
    %67 = tpu.dynamic_rotate %45 by %c15_i32 dim 1 : vector<4x256xf32>, i32 -> vector<4x256xf32>
    %68 = vector.extract_strided_slice %3 {offsets = [2, 0], sizes = [1, 256], strides = [1, 1]} : vector<9x256xf32> to vector<1x256xf32>
    %69 = vector.broadcast %68 : vector<1x256xf32> to vector<4x256xf32>
    %70 = arith.mulf %67, %69 : vector<4x256xf32>
    %71 = vector.extract_strided_slice %1 {offsets = [2, 0, 0], sizes = [1, 4, 4], strides = [1, 1, 1]} : vector<9x4x4xf32> to vector<1x4x4xf32>
    %72 = vector.shape_cast %71 : vector<1x4x4xf32> to vector<4x4xf32>
    %cst_30 = arith.constant dense<0.000000e+00> : vector<4x256xf32>
    %73 = tpu.matmul %72, %70, %cst_30 {dimension_numbers = #tpu.dot_dimension_numbers<[1], [0], [0], [1], [0, 0, 1, 1], [], []>} : vector<4x4xf32>, vector<4x256xf32>, vector<4x256xf32> -> vector<4x256xf32>
    %74 = arith.addf %66, %73 : vector<4x256xf32>
    %c1_i32 = arith.constant 1 : i32
    %75 = tpu.dynamic_rotate %45 by %c1_i32 dim 1 : vector<4x256xf32>, i32 -> vector<4x256xf32>
    %76 = vector.extract_strided_slice %3 {offsets = [3, 0], sizes = [1, 256], strides = [1, 1]} : vector<9x256xf32> to vector<1x256xf32>
    %77 = vector.broadcast %76 : vector<1x256xf32> to vector<4x256xf32>
    %78 = arith.mulf %75, %77 : vector<4x256xf32>
    %79 = vector.extract_strided_slice %1 {offsets = [3, 0, 0], sizes = [1, 4, 4], strides = [1, 1, 1]} : vector<9x4x4xf32> to vector<1x4x4xf32>
    %80 = vector.shape_cast %79 : vector<1x4x4xf32> to vector<4x4xf32>
    %cst_31 = arith.constant dense<0.000000e+00> : vector<4x256xf32>
    %81 = tpu.matmul %80, %78, %cst_31 {dimension_numbers = #tpu.dot_dimension_numbers<[1], [0], [0], [1], [0, 0, 1, 1], [], []>} : vector<4x4xf32>, vector<4x256xf32>, vector<4x256xf32> -> vector<4x256xf32>
    %82 = arith.addf %74, %81 : vector<4x256xf32>
    %c255_i32 = arith.constant 255 : i32
    %83 = tpu.dynamic_rotate %45 by %c255_i32 dim 1 : vector<4x256xf32>, i32 -> vector<4x256xf32>
    %84 = vector.extract_strided_slice %3 {offsets = [5, 0], sizes = [1, 256], strides = [1, 1]} : vector<9x256xf32> to vector<1x256xf32>
    %85 = vector.broadcast %84 : vector<1x256xf32> to vector<4x256xf32>
    %86 = arith.mulf %83, %85 : vector<4x256xf32>
    %87 = vector.extract_strided_slice %1 {offsets = [5, 0, 0], sizes = [1, 4, 4], strides = [1, 1, 1]} : vector<9x4x4xf32> to vector<1x4x4xf32>
    %88 = vector.shape_cast %87 : vector<1x4x4xf32> to vector<4x4xf32>
    %cst_32 = arith.constant dense<0.000000e+00> : vector<4x256xf32>
    %89 = tpu.matmul %88, %86, %cst_32 {dimension_numbers = #tpu.dot_dimension_numbers<[1], [0], [0], [1], [0, 0, 1, 1], [], []>} : vector<4x4xf32>, vector<4x256xf32>, vector<4x256xf32> -> vector<4x256xf32>
    %90 = arith.addf %82, %89 : vector<4x256xf32>
    %c241_i32 = arith.constant 241 : i32
    %91 = tpu.dynamic_rotate %45 by %c241_i32 dim 1 : vector<4x256xf32>, i32 -> vector<4x256xf32>
    %92 = vector.extract_strided_slice %3 {offsets = [6, 0], sizes = [1, 256], strides = [1, 1]} : vector<9x256xf32> to vector<1x256xf32>
    %93 = vector.broadcast %92 : vector<1x256xf32> to vector<4x256xf32>
    %94 = arith.mulf %91, %93 : vector<4x256xf32>
    %95 = vector.extract_strided_slice %1 {offsets = [6, 0, 0], sizes = [1, 4, 4], strides = [1, 1, 1]} : vector<9x4x4xf32> to vector<1x4x4xf32>
    %96 = vector.shape_cast %95 : vector<1x4x4xf32> to vector<4x4xf32>
    %cst_33 = arith.constant dense<0.000000e+00> : vector<4x256xf32>
    %97 = tpu.matmul %96, %94, %cst_33 {dimension_numbers = #tpu.dot_dimension_numbers<[1], [0], [0], [1], [0, 0, 1, 1], [], []>} : vector<4x4xf32>, vector<4x256xf32>, vector<4x256xf32> -> vector<4x256xf32>
    %98 = arith.addf %90, %97 : vector<4x256xf32>
    %c240_i32 = arith.constant 240 : i32
    %99 = tpu.dynamic_rotate %45 by %c240_i32 dim 1 : vector<4x256xf32>, i32 -> vector<4x256xf32>
    %100 = vector.extract_strided_slice %3 {offsets = [7, 0], sizes = [1, 256], strides = [1, 1]} : vector<9x256xf32> to vector<1x256xf32>
    %101 = vector.broadcast %100 : vector<1x256xf32> to vector<4x256xf32>
    %102 = arith.mulf %99, %101 : vector<4x256xf32>
    %103 = vector.extract_strided_slice %1 {offsets = [7, 0, 0], sizes = [1, 4, 4], strides = [1, 1, 1]} : vector<9x4x4xf32> to vector<1x4x4xf32>
    %104 = vector.shape_cast %103 : vector<1x4x4xf32> to vector<4x4xf32>
    %cst_34 = arith.constant dense<0.000000e+00> : vector<4x256xf32>
    %105 = tpu.matmul %104, %102, %cst_34 {dimension_numbers = #tpu.dot_dimension_numbers<[1], [0], [0], [1], [0, 0, 1, 1], [], []>} : vector<4x4xf32>, vector<4x256xf32>, vector<4x256xf32> -> vector<4x256xf32>
    %106 = arith.addf %98, %105 : vector<4x256xf32>
    %c239_i32 = arith.constant 239 : i32
    %107 = tpu.dynamic_rotate %45 by %c239_i32 dim 1 : vector<4x256xf32>, i32 -> vector<4x256xf32>
    %108 = vector.extract_strided_slice %3 {offsets = [8, 0], sizes = [1, 256], strides = [1, 1]} : vector<9x256xf32> to vector<1x256xf32>
    %109 = vector.broadcast %108 : vector<1x256xf32> to vector<4x256xf32>
    %110 = arith.mulf %107, %109 : vector<4x256xf32>
    %111 = vector.extract_strided_slice %1 {offsets = [8, 0, 0], sizes = [1, 4, 4], strides = [1, 1, 1]} : vector<9x4x4xf32> to vector<1x4x4xf32>
    %112 = vector.shape_cast %111 : vector<1x4x4xf32> to vector<4x4xf32>
    %cst_35 = arith.constant dense<0.000000e+00> : vector<4x256xf32>
    %113 = tpu.matmul %112, %110, %cst_35 {dimension_numbers = #tpu.dot_dimension_numbers<[1], [0], [0], [1], [0, 0, 1, 1], [], []>} : vector<4x4xf32>, vector<4x256xf32>, vector<4x256xf32> -> vector<4x256xf32>
    %114 = arith.addf %106, %113 : vector<4x256xf32>
    %115 = vector.extract_strided_slice %1 {offsets = [4, 0, 0], sizes = [1, 4, 4], strides = [1, 1, 1]} : vector<9x4x4xf32> to vector<1x4x4xf32>
    %116 = vector.shape_cast %115 : vector<1x4x4xf32> to vector<4x4xf32>
    %cst_36 = arith.constant dense<0.000000e+00> : vector<4x256xf32>
    %117 = tpu.matmul %116, %47, %cst_36 {dimension_numbers = #tpu.dot_dimension_numbers<[1], [0], [0], [1], [0, 0, 1, 1], [], []>} : vector<4x4xf32>, vector<4x256xf32>, vector<4x256xf32> -> vector<4x256xf32>
    %c17_i32_37 = arith.constant 17 : i32
    %118 = tpu.dynamic_rotate %47 by %c17_i32_37 dim 1 : vector<4x256xf32>, i32 -> vector<4x256xf32>
    %119 = vector.extract_strided_slice %3 {offsets = [0, 0], sizes = [1, 256], strides = [1, 1]} : vector<9x256xf32> to vector<1x256xf32>
    %120 = vector.broadcast %119 : vector<1x256xf32> to vector<4x256xf32>
    %121 = arith.mulf %118, %120 : vector<4x256xf32>
    %122 = vector.extract_strided_slice %1 {offsets = [0, 0, 0], sizes = [1, 4, 4], strides = [1, 1, 1]} : vector<9x4x4xf32> to vector<1x4x4xf32>
    %123 = vector.shape_cast %122 : vector<1x4x4xf32> to vector<4x4xf32>
    %cst_38 = arith.constant dense<0.000000e+00> : vector<4x256xf32>
    %124 = tpu.matmul %123, %121, %cst_38 {dimension_numbers = #tpu.dot_dimension_numbers<[1], [0], [0], [1], [0, 0, 1, 1], [], []>} : vector<4x4xf32>, vector<4x256xf32>, vector<4x256xf32> -> vector<4x256xf32>
    %125 = arith.addf %117, %124 : vector<4x256xf32>
    %c16_i32_39 = arith.constant 16 : i32
    %126 = tpu.dynamic_rotate %47 by %c16_i32_39 dim 1 : vector<4x256xf32>, i32 -> vector<4x256xf32>
    %127 = vector.extract_strided_slice %3 {offsets = [1, 0], sizes = [1, 256], strides = [1, 1]} : vector<9x256xf32> to vector<1x256xf32>
    %128 = vector.broadcast %127 : vector<1x256xf32> to vector<4x256xf32>
    %129 = arith.mulf %126, %128 : vector<4x256xf32>
    %130 = vector.extract_strided_slice %1 {offsets = [1, 0, 0], sizes = [1, 4, 4], strides = [1, 1, 1]} : vector<9x4x4xf32> to vector<1x4x4xf32>
    %131 = vector.shape_cast %130 : vector<1x4x4xf32> to vector<4x4xf32>
    %cst_40 = arith.constant dense<0.000000e+00> : vector<4x256xf32>
    %132 = tpu.matmul %131, %129, %cst_40 {dimension_numbers = #tpu.dot_dimension_numbers<[1], [0], [0], [1], [0, 0, 1, 1], [], []>} : vector<4x4xf32>, vector<4x256xf32>, vector<4x256xf32> -> vector<4x256xf32>
    %133 = arith.addf %125, %132 : vector<4x256xf32>
    %c15_i32_41 = arith.constant 15 : i32
    %134 = tpu.dynamic_rotate %47 by %c15_i32_41 dim 1 : vector<4x256xf32>, i32 -> vector<4x256xf32>
    %135 = vector.extract_strided_slice %3 {offsets = [2, 0], sizes = [1, 256], strides = [1, 1]} : vector<9x256xf32> to vector<1x256xf32>
    %136 = vector.broadcast %135 : vector<1x256xf32> to vector<4x256xf32>
    %137 = arith.mulf %134, %136 : vector<4x256xf32>
    %138 = vector.extract_strided_slice %1 {offsets = [2, 0, 0], sizes = [1, 4, 4], strides = [1, 1, 1]} : vector<9x4x4xf32> to vector<1x4x4xf32>
    %139 = vector.shape_cast %138 : vector<1x4x4xf32> to vector<4x4xf32>
    %cst_42 = arith.constant dense<0.000000e+00> : vector<4x256xf32>
    %140 = tpu.matmul %139, %137, %cst_42 {dimension_numbers = #tpu.dot_dimension_numbers<[1], [0], [0], [1], [0, 0, 1, 1], [], []>} : vector<4x4xf32>, vector<4x256xf32>, vector<4x256xf32> -> vector<4x256xf32>
    %141 = arith.addf %133, %140 : vector<4x256xf32>
    %c1_i32_43 = arith.constant 1 : i32
    %142 = tpu.dynamic_rotate %47 by %c1_i32_43 dim 1 : vector<4x256xf32>, i32 -> vector<4x256xf32>
    %143 = vector.extract_strided_slice %3 {offsets = [3, 0], sizes = [1, 256], strides = [1, 1]} : vector<9x256xf32> to vector<1x256xf32>
    %144 = vector.broadcast %143 : vector<1x256xf32> to vector<4x256xf32>
    %145 = arith.mulf %142, %144 : vector<4x256xf32>
    %146 = vector.extract_strided_slice %1 {offsets = [3, 0, 0], sizes = [1, 4, 4], strides = [1, 1, 1]} : vector<9x4x4xf32> to vector<1x4x4xf32>
    %147 = vector.shape_cast %146 : vector<1x4x4xf32> to vector<4x4xf32>
    %cst_44 = arith.constant dense<0.000000e+00> : vector<4x256xf32>
    %148 = tpu.matmul %147, %145, %cst_44 {dimension_numbers = #tpu.dot_dimension_numbers<[1], [0], [0], [1], [0, 0, 1, 1], [], []>} : vector<4x4xf32>, vector<4x256xf32>, vector<4x256xf32> -> vector<4x256xf32>
    %149 = arith.addf %141, %148 : vector<4x256xf32>
    %c255_i32_45 = arith.constant 255 : i32
    %150 = tpu.dynamic_rotate %47 by %c255_i32_45 dim 1 : vector<4x256xf32>, i32 -> vector<4x256xf32>
    %151 = vector.extract_strided_slice %3 {offsets = [5, 0], sizes = [1, 256], strides = [1, 1]} : vector<9x256xf32> to vector<1x256xf32>
    %152 = vector.broadcast %151 : vector<1x256xf32> to vector<4x256xf32>
    %153 = arith.mulf %150, %152 : vector<4x256xf32>
    %154 = vector.extract_strided_slice %1 {offsets = [5, 0, 0], sizes = [1, 4, 4], strides = [1, 1, 1]} : vector<9x4x4xf32> to vector<1x4x4xf32>
    %155 = vector.shape_cast %154 : vector<1x4x4xf32> to vector<4x4xf32>
    %cst_46 = arith.constant dense<0.000000e+00> : vector<4x256xf32>
    %156 = tpu.matmul %155, %153, %cst_46 {dimension_numbers = #tpu.dot_dimension_numbers<[1], [0], [0], [1], [0, 0, 1, 1], [], []>} : vector<4x4xf32>, vector<4x256xf32>, vector<4x256xf32> -> vector<4x256xf32>
    %157 = arith.addf %149, %156 : vector<4x256xf32>
    %c241_i32_47 = arith.constant 241 : i32
    %158 = tpu.dynamic_rotate %47 by %c241_i32_47 dim 1 : vector<4x256xf32>, i32 -> vector<4x256xf32>
    %159 = vector.extract_strided_slice %3 {offsets = [6, 0], sizes = [1, 256], strides = [1, 1]} : vector<9x256xf32> to vector<1x256xf32>
    %160 = vector.broadcast %159 : vector<1x256xf32> to vector<4x256xf32>
    %161 = arith.mulf %158, %160 : vector<4x256xf32>
    %162 = vector.extract_strided_slice %1 {offsets = [6, 0, 0], sizes = [1, 4, 4], strides = [1, 1, 1]} : vector<9x4x4xf32> to vector<1x4x4xf32>
    %163 = vector.shape_cast %162 : vector<1x4x4xf32> to vector<4x4xf32>
    %cst_48 = arith.constant dense<0.000000e+00> : vector<4x256xf32>
    %164 = tpu.matmul %163, %161, %cst_48 {dimension_numbers = #tpu.dot_dimension_numbers<[1], [0], [0], [1], [0, 0, 1, 1], [], []>} : vector<4x4xf32>, vector<4x256xf32>, vector<4x256xf32> -> vector<4x256xf32>
    %165 = arith.addf %157, %164 : vector<4x256xf32>
    %c240_i32_49 = arith.constant 240 : i32
    %166 = tpu.dynamic_rotate %47 by %c240_i32_49 dim 1 : vector<4x256xf32>, i32 -> vector<4x256xf32>
    %167 = vector.extract_strided_slice %3 {offsets = [7, 0], sizes = [1, 256], strides = [1, 1]} : vector<9x256xf32> to vector<1x256xf32>
    %168 = vector.broadcast %167 : vector<1x256xf32> to vector<4x256xf32>
    %169 = arith.mulf %166, %168 : vector<4x256xf32>
    %170 = vector.extract_strided_slice %1 {offsets = [7, 0, 0], sizes = [1, 4, 4], strides = [1, 1, 1]} : vector<9x4x4xf32> to vector<1x4x4xf32>
    %171 = vector.shape_cast %170 : vector<1x4x4xf32> to vector<4x4xf32>
    %cst_50 = arith.constant dense<0.000000e+00> : vector<4x256xf32>
    %172 = tpu.matmul %171, %169, %cst_50 {dimension_numbers = #tpu.dot_dimension_numbers<[1], [0], [0], [1], [0, 0, 1, 1], [], []>} : vector<4x4xf32>, vector<4x256xf32>, vector<4x256xf32> -> vector<4x256xf32>
    %173 = arith.addf %165, %172 : vector<4x256xf32>
    %c239_i32_51 = arith.constant 239 : i32
    %174 = tpu.dynamic_rotate %47 by %c239_i32_51 dim 1 : vector<4x256xf32>, i32 -> vector<4x256xf32>
    %175 = vector.extract_strided_slice %3 {offsets = [8, 0], sizes = [1, 256], strides = [1, 1]} : vector<9x256xf32> to vector<1x256xf32>
    %176 = vector.broadcast %175 : vector<1x256xf32> to vector<4x256xf32>
    %177 = arith.mulf %174, %176 : vector<4x256xf32>
    %178 = vector.extract_strided_slice %1 {offsets = [8, 0, 0], sizes = [1, 4, 4], strides = [1, 1, 1]} : vector<9x4x4xf32> to vector<1x4x4xf32>
    %179 = vector.shape_cast %178 : vector<1x4x4xf32> to vector<4x4xf32>
    %cst_52 = arith.constant dense<0.000000e+00> : vector<4x256xf32>
    %180 = tpu.matmul %179, %177, %cst_52 {dimension_numbers = #tpu.dot_dimension_numbers<[1], [0], [0], [1], [0, 0, 1, 1], [], []>} : vector<4x4xf32>, vector<4x256xf32>, vector<4x256xf32> -> vector<4x256xf32>
    %181 = arith.addf %173, %180 : vector<4x256xf32>
    %c0_53 = arith.constant 0 : index
    %c2 = arith.constant 2 : index
    %182 = vector.load %arg5[%c0_53, %c2] : memref<16x6xf32, #tpu.memory_space<vmem>>, vector<4x1xf32>
    %c0_54 = arith.constant 0 : index
    %c3 = arith.constant 3 : index
    %183 = vector.load %arg5[%c0_54, %c3] : memref<16x6xf32, #tpu.memory_space<vmem>>, vector<4x1xf32>
    %cst_55 = arith.constant dense<0.000000e+00> : vector<4xf32>
    %184 = vector.multi_reduction <add>, %114, %cst_55 [1] : vector<4x256xf32> to vector<4xf32>
    %185 = vector.shape_cast %184 : vector<4xf32> to vector<4x1xf32>
    %186 = arith.mulf %114, %114 : vector<4x256xf32>
    %cst_56 = arith.constant dense<0.000000e+00> : vector<4xf32>
    %187 = vector.multi_reduction <add>, %186, %cst_56 [1] : vector<4x256xf32> to vector<4xf32>
    %188 = vector.shape_cast %187 : vector<4xf32> to vector<4x1xf32>
    %cst_57 = arith.constant dense<0.000000e+00> : vector<4xf32>
    %189 = vector.multi_reduction <add>, %181, %cst_57 [1] : vector<4x256xf32> to vector<4xf32>
    %190 = vector.shape_cast %189 : vector<4xf32> to vector<4x1xf32>
    %191 = arith.addf %185, %190 : vector<4x1xf32>
    %192 = arith.mulf %181, %181 : vector<4x256xf32>
    %cst_58 = arith.constant dense<0.000000e+00> : vector<4xf32>
    %193 = vector.multi_reduction <add>, %192, %cst_58 [1] : vector<4x256xf32> to vector<4xf32>
    %194 = vector.shape_cast %193 : vector<4xf32> to vector<4x1xf32>
    %195 = arith.addf %188, %194 : vector<4x1xf32>
    %cst_59 = arith.constant 0.001953125 : f32
    %196 = vector.broadcast %cst_59 : f32 to vector<4x1xf32>
    %197 = arith.mulf %191, %196 : vector<4x1xf32>
    %cst_60 = arith.constant 0.001953125 : f32
    %198 = vector.broadcast %cst_60 : f32 to vector<4x1xf32>
    %199 = arith.mulf %195, %198 : vector<4x1xf32>
    %200 = arith.mulf %197, %197 : vector<4x1xf32>
    %201 = arith.subf %199, %200 : vector<4x1xf32>
    %cst_61 = arith.constant 9.99999974E-6 : f32
    %202 = vector.broadcast %cst_61 : f32 to vector<4x1xf32>
    %203 = arith.addf %201, %202 : vector<4x1xf32>
    %204 = math.rsqrt %203 : vector<4x1xf32>
    %205 = arith.mulf %182, %204 : vector<4x1xf32>
    %206 = arith.mulf %197, %205 : vector<4x1xf32>
    %207 = arith.subf %183, %206 : vector<4x1xf32>
    %208 = vector.broadcast %205 : vector<4x1xf32> to vector<4x256xf32>
    %209 = arith.mulf %114, %208 : vector<4x256xf32>
    %210 = vector.broadcast %207 : vector<4x1xf32> to vector<4x256xf32>
    %211 = arith.addf %209, %210 : vector<4x256xf32>
    %212 = vector.broadcast %205 : vector<4x1xf32> to vector<4x256xf32>
    %213 = arith.mulf %181, %212 : vector<4x256xf32>
    %214 = vector.broadcast %207 : vector<4x1xf32> to vector<4x256xf32>
    %215 = arith.addf %213, %214 : vector<4x256xf32>
    %cst_62 = arith.constant 0.000000e+00 : f32
    %216 = vector.broadcast %cst_62 : f32 to vector<4x256xf32>
    %217 = arith.maximumf %211, %216 : vector<4x256xf32>
    %cst_63 = arith.constant 0.000000e+00 : f32
    %218 = vector.broadcast %cst_63 : f32 to vector<4x256xf32>
    %219 = arith.maximumf %215, %218 : vector<4x256xf32>
    %cst_64 = arith.constant dense<0.000000e+00> : vector<16x256xf32>
    %220 = tpu.matmul %2, %217, %cst_64 {dimension_numbers = #tpu.dot_dimension_numbers<[1], [0], [0], [1], [0, 0, 1, 1], [], []>} : vector<16x4xf32>, vector<4x256xf32>, vector<16x256xf32> -> vector<16x256xf32>
    %cst_65 = arith.constant dense<0.000000e+00> : vector<16x256xf32>
    %221 = tpu.matmul %2, %219, %cst_65 {dimension_numbers = #tpu.dot_dimension_numbers<[1], [0], [0], [1], [0, 0, 1, 1], [], []>} : vector<16x4xf32>, vector<4x256xf32>, vector<16x256xf32> -> vector<16x256xf32>
    %c0_66 = arith.constant 0 : index
    %c4 = arith.constant 4 : index
    %222 = vector.load %arg5[%c0_66, %c4] : memref<16x6xf32, #tpu.memory_space<vmem>>, vector<16x1xf32>
    %c0_67 = arith.constant 0 : index
    %c5 = arith.constant 5 : index
    %223 = vector.load %arg5[%c0_67, %c5] : memref<16x6xf32, #tpu.memory_space<vmem>>, vector<16x1xf32>
    %cst_68 = arith.constant dense<0.000000e+00> : vector<16xf32>
    %224 = vector.multi_reduction <add>, %220, %cst_68 [1] : vector<16x256xf32> to vector<16xf32>
    %225 = vector.shape_cast %224 : vector<16xf32> to vector<16x1xf32>
    %226 = arith.mulf %220, %220 : vector<16x256xf32>
    %cst_69 = arith.constant dense<0.000000e+00> : vector<16xf32>
    %227 = vector.multi_reduction <add>, %226, %cst_69 [1] : vector<16x256xf32> to vector<16xf32>
    %228 = vector.shape_cast %227 : vector<16xf32> to vector<16x1xf32>
    %cst_70 = arith.constant dense<0.000000e+00> : vector<16xf32>
    %229 = vector.multi_reduction <add>, %221, %cst_70 [1] : vector<16x256xf32> to vector<16xf32>
    %230 = vector.shape_cast %229 : vector<16xf32> to vector<16x1xf32>
    %231 = arith.addf %225, %230 : vector<16x1xf32>
    %232 = arith.mulf %221, %221 : vector<16x256xf32>
    %cst_71 = arith.constant dense<0.000000e+00> : vector<16xf32>
    %233 = vector.multi_reduction <add>, %232, %cst_71 [1] : vector<16x256xf32> to vector<16xf32>
    %234 = vector.shape_cast %233 : vector<16xf32> to vector<16x1xf32>
    %235 = arith.addf %228, %234 : vector<16x1xf32>
    %cst_72 = arith.constant 0.001953125 : f32
    %236 = vector.broadcast %cst_72 : f32 to vector<16x1xf32>
    %237 = arith.mulf %231, %236 : vector<16x1xf32>
    %cst_73 = arith.constant 0.001953125 : f32
    %238 = vector.broadcast %cst_73 : f32 to vector<16x1xf32>
    %239 = arith.mulf %235, %238 : vector<16x1xf32>
    %240 = arith.mulf %237, %237 : vector<16x1xf32>
    %241 = arith.subf %239, %240 : vector<16x1xf32>
    %cst_74 = arith.constant 9.99999974E-6 : f32
    %242 = vector.broadcast %cst_74 : f32 to vector<16x1xf32>
    %243 = arith.addf %241, %242 : vector<16x1xf32>
    %244 = math.rsqrt %243 : vector<16x1xf32>
    %245 = arith.mulf %222, %244 : vector<16x1xf32>
    %246 = arith.mulf %237, %245 : vector<16x1xf32>
    %247 = arith.subf %223, %246 : vector<16x1xf32>
    %248 = vector.broadcast %245 : vector<16x1xf32> to vector<16x256xf32>
    %249 = arith.mulf %220, %248 : vector<16x256xf32>
    %250 = vector.broadcast %247 : vector<16x1xf32> to vector<16x256xf32>
    %251 = arith.addf %249, %250 : vector<16x256xf32>
    %252 = vector.broadcast %245 : vector<16x1xf32> to vector<16x256xf32>
    %253 = arith.mulf %221, %252 : vector<16x256xf32>
    %254 = vector.broadcast %247 : vector<16x1xf32> to vector<16x256xf32>
    %255 = arith.addf %253, %254 : vector<16x256xf32>
    %c0_75 = arith.constant 0 : index
    %c0_76 = arith.constant 0 : index
    %c0_77 = arith.constant 0 : index
    %256 = vector.load %arg1[%c0_75, %c0_76, %c0_77] : memref<2x16x256xf32, #tpu.memory_space<vmem>>, vector<1x16x256xf32>
    %257 = vector.shape_cast %256 : vector<1x16x256xf32> to vector<16x256xf32>
    %258 = arith.addf %251, %257 : vector<16x256xf32>
    %cst_78 = arith.constant 0.000000e+00 : f32
    %259 = vector.broadcast %cst_78 : f32 to vector<16x256xf32>
    %260 = arith.maximumf %258, %259 : vector<16x256xf32>
    %c0_79 = arith.constant 0 : index
    %c0_80 = arith.constant 0 : index
    %c0_81 = arith.constant 0 : index
    %261 = vector.load %arg7[%c0_79, %c0_80, %c0_81] : memref<2x16x256xf32, #tpu.memory_space<vmem>>, vector<1x16x256xf32>
    %262 = vector.shape_cast %261 : vector<1x16x256xf32> to vector<16x256xf32>
    %263 = vector.shape_cast %260 : vector<16x256xf32> to vector<1x16x256xf32>
    tpu.vector_store %arg7[%c0_79, %c0_80, %c0_81], %263 {strides = array<i32>} : memref<2x16x256xf32, #tpu.memory_space<vmem>>, vector<1x16x256xf32>,
    %c1_82 = arith.constant 1 : index
    %c0_83 = arith.constant 0 : index
    %c0_84 = arith.constant 0 : index
    %264 = vector.load %arg1[%c1_82, %c0_83, %c0_84] : memref<2x16x256xf32, #tpu.memory_space<vmem>>, vector<1x16x256xf32>
    %265 = vector.shape_cast %264 : vector<1x16x256xf32> to vector<16x256xf32>
    %266 = arith.addf %255, %265 : vector<16x256xf32>
    %cst_85 = arith.constant 0.000000e+00 : f32
    %267 = vector.broadcast %cst_85 : f32 to vector<16x256xf32>
    %268 = arith.maximumf %266, %267 : vector<16x256xf32>
    %c1_86 = arith.constant 1 : index
    %c0_87 = arith.constant 0 : index
    %c0_88 = arith.constant 0 : index
    %269 = vector.load %arg7[%c1_86, %c0_87, %c0_88] : memref<2x16x256xf32, #tpu.memory_space<vmem>>, vector<1x16x256xf32>
    %270 = vector.shape_cast %269 : vector<1x16x256xf32> to vector<16x256xf32>
    %271 = vector.shape_cast %268 : vector<16x256xf32> to vector<1x16x256xf32>
    tpu.vector_store %arg7[%c1_86, %c0_87, %c0_88], %271 {strides = array<i32>} : memref<2x16x256xf32, #tpu.memory_space<vmem>>, vector<1x16x256xf32>,
    return
  }
  func.func @transform_0(%arg0: i32) -> (i32, i32, i32) {
    %c0_i32 = arith.constant 0 : i32
    %c0_i32_0 = arith.constant 0 : i32
    %c0_i32_1 = arith.constant 0 : i32
    %c0_i32_2 = arith.constant 0 : i32
    return %c0_i32, %c0_i32_0, %c0_i32_1 : i32, i32, i32
  }
  func.func @transform_1(%arg0: i32) -> (i32, i32) {
    %c0_i32 = arith.constant 0 : i32
    %c0_i32_0 = arith.constant 0 : i32
    %c0_i32_1 = arith.constant 0 : i32
    return %c0_i32, %c0_i32_0 : i32, i32
  }
  func.func @transform_2(%arg0: i32) -> (i32, i32, i32) {
    %c0_i32 = arith.constant 0 : i32
    %c0_i32_0 = arith.constant 0 : i32
    %c0_i32_1 = arith.constant 0 : i32
    %c0_i32_2 = arith.constant 0 : i32
    return %c0_i32, %c0_i32_0, %c0_i32_1 : i32, i32, i32
  }
  func.func @transform_3(%arg0: i32) -> (i32, i32) {
    %c0_i32 = arith.constant 0 : i32
    %c0_i32_0 = arith.constant 0 : i32
    %c0_i32_1 = arith.constant 0 : i32
    return %c0_i32, %c0_i32_0 : i32, i32
  }
  func.func @transform_4(%arg0: i32) -> (i32, i32) {
    %c0_i32 = arith.constant 0 : i32
    %c0_i32_0 = arith.constant 0 : i32
    %c0_i32_1 = arith.constant 0 : i32
    return %c0_i32, %c0_i32_0 : i32, i32
  }
  func.func @transform_5(%arg0: i32) -> (i32, i32) {
    %c0_i32 = arith.constant 0 : i32
    %c0_i32_0 = arith.constant 0 : i32
    %c0_i32_1 = arith.constant 0 : i32
    return %c0_i32, %c0_i32_0 : i32, i32
  }
  func.func @transform_6(%arg0: i32) -> (i32, i32, i32) {
    %c0_i32 = arith.constant 0 : i32
    %c0_i32_0 = arith.constant 0 : i32
    %c0_i32_1 = arith.constant 0 : i32
    %c0_i32_2 = arith.constant 0 : i32
    return %c0_i32, %c0_i32_0, %c0_i32_1 : i32, i32, i32
  }
}

</mosaic_0001>

<llo_original>
// kernel: tpu_custom_call.1
$region0: #{tpu_custom_call.1}
  #allocation0 [shape = 'u32[]', space=smem, size = 0x4, offset = 0x4, fixed_abs, tag = 'smem constant byte address 0x4 - core index']
  #allocation1 [shape = 'u32[144,128]{1,0:T(1,128)}', space=vmem, size = 0x12000, scoped, tag = 'internal scratch']
  %s0 = inlined_call_operand.vmem [shape: f32[2,16,256], index: 0, kind: input, shape index: {}]
  %s1 = inlined_call_operand.hbm [shape: f32[4,16], index: 1, kind: input, shape index: {}]
  %s2 = inlined_call_operand.vmem [shape: f32[9,4,4], index: 2, kind: input, shape index: {}]
  %s3 = inlined_call_operand.vmem [shape: f32[16,4], index: 3, kind: input, shape index: {}]
  %s4 = inlined_call_operand.vmem [shape: f32[16,6], index: 4, kind: input, shape index: {}]
  %s5 = inlined_call_operand.vmem [shape: f32[9,256], index: 5, kind: input, shape index: {}]
  %s6 = inlined_call_operand.hbm [shape: f32[2,16,256], index: 6, kind: output, shape index: {}]
  %s7 = sld [smem:[#allocation0]]
  $region38: #{tpu_custom_call.1} parent=0
    _
  %s9 = ssub.s32 1, %s7
  %s10 = scalar_select 0, %s9, %s7
  $region1: #{tpu_custom_call.1} parent=0
    #allocation2 [shape = 'u8[2048]{0}', space=vmem, size = 0x800, scoped, tag = 'input window, operand 1, single buffered']
    #allocation3 [shape = 's32[1]{0}', space=sflag, size = 0x4, scoped, tag = 'scoped memory for tpu_custom_call.1']
    #allocation4 [shape = 's32[1]{0}', space=sflag, size = 0x4, scoped, tag = 'scoped memory for tpu_custom_call.1']
    #allocation5 [shape = 'u8[32768]{0}', space=vmem, size = 0x8000, scoped, tag = 'output window, operand 0, single buffered']
    %11 = vsyncpa [#allocation3], 0
    %12 = vsyncpa [#allocation4], 0
    // Predicated region
    $region2: #{tpu_custom_call.1} parent=1 // pred_check
      _
    $region3: #{tpu_custom_call.1} parent=1 // pred_check_branch
      %14 = sbr.rel (0) target = $region5
    $region4: #{tpu_custom_call.1} parent=1 // pred_region
      _
    $region5: #{tpu_custom_call.1} parent=1 // pred_fallthru
      _
    // Predicated region
    $region6: #{tpu_custom_call.1} parent=1 // pred_check
      _
    $region7: #{tpu_custom_call.1} parent=1 // pred_check_branch
      %16 = sbr.rel (0) target = $region9
    $region8: #{tpu_custom_call.1} parent=1 // pred_region
      %s18 = ssub.s32 64, 64
      %19 = vsyncadd [#allocation3], %s18
      %s21 = sshll.u32 [#allocation2], 4
      %s22 = int_to_ptr.vmem [resolvable:$true] %s21
      %24 = dma.hbm_to_vmem [thread:$0]  %s1, 64, %s22, [#allocation3]
    $region9: #{tpu_custom_call.1} parent=1 // pred_fallthru
      _
    // Predicated region
    $region10: #{tpu_custom_call.1} parent=1 // pred_check
      _
    $region11: #{tpu_custom_call.1} parent=1 // pred_check_branch
      %26 = sbr.rel (0) target = $region13
    $region12: #{tpu_custom_call.1} parent=1 // pred_region
      _
    $region13: #{tpu_custom_call.1} parent=1 // pred_fallthru
      _
    // Predicated region
    $region14: #{tpu_custom_call.1} parent=1 // pred_check
      _
    $region15: #{tpu_custom_call.1} parent=1 // pred_check_branch
      %28 = sbr.rel (0) target = $region17
    $region16: #{tpu_custom_call.1} parent=1 // pred_region
      _
    $region17: #{tpu_custom_call.1} parent=1 // pred_fallthru
      _
    // Predicated region
    $region18: #{tpu_custom_call.1} parent=1 // pred_check
      _
    $region19: #{tpu_custom_call.1} parent=1 // pred_check_branch
      %30 = sbr.rel (0) target = $region21
    $region20: #{tpu_custom_call.1} parent=1 // pred_region
      _
    $region21: #{tpu_custom_call.1} parent=1 // pred_fallthru
      _
    // Predicated region
    $region22: #{tpu_custom_call.1} parent=1 // pred_check
      _
    $region23: #{tpu_custom_call.1} parent=1 // pred_check_branch
      %32 = sbr.rel (0) target = $region25
    $region24: #{tpu_custom_call.1} parent=1 // pred_region
      _
    $region25: #{tpu_custom_call.1} parent=1 // pred_fallthru
      _
    // Predicated region
    $region26: #{tpu_custom_call.1} parent=1 // pred_check
      _
    $region27: #{tpu_custom_call.1} parent=1 // pred_check_branch
      %34 = sbr.rel (0) target = $region29
    $region28: #{tpu_custom_call.1} parent=1 // pred_region
      %35 = dma.done [#allocation3], 64
    $region29: #{tpu_custom_call.1} parent=1 // pred_fallthru
      _
    %v36 = vld [vmem:[#allocation2] sm:$0xf]
    %v37 = vld [vmem:[%s2] sm:$0xf]
    %v38 = vld [vmem:[%s2 + $0x4] sm:$0xf]
    %v39 = vld [vmem:[%s2 + $0x8] sm:$0xf]
    %v40 = vld [vmem:[%s2 + $0xc] sm:$0xf]
    %v41 = vld [vmem:[%s2 + $0x10] sm:$0xf]
    %v42 = vld [vmem:[%s2 + $0x14] sm:$0xf]
    %v43 = vld [vmem:[%s2 + $0x18] sm:$0xf]
    %v44 = vld [vmem:[%s2 + $0x1c] sm:$0xf]
    %v45 = vld [vmem:[%s2 + $0x20] sm:$0xf]
    %v46 = vld [vmem:[%s3] sm:$0xff]
    %v47 = vld [vmem:[%s3 + $0x8] sm:$0xff]
    %v48 = vld [vmem:[%s5] sm:$0xff]
    %v49 = vld [vmem:[%s5 + $0x8] sm:$0xff]
    %v50 = vld [vmem:[%s5 + $0x10] sm:$0x1]
    %v51 = vld [vmem:[%s5 + $0x18] sm:$0x1]
    %v52 = vld [vmem:[%s0] sm:$0xff]
    %v53 = vld [vmem:[%s0 + $0x8] sm:$0xff]
    %v54 = vld [vmem:[%s0 + $0x10] sm:$0xff]
    %v55 = vld [vmem:[%s0 + $0x18] sm:$0xff]
    %vm56 = vcmask 130048
    %v58 = vsel %vm56, %v36, 0
    %60 = vmatprep.subr.mxu0 %v53
    %61 = vmatpush1.msra.mxu0 %v52
    %62 = vmatprep.subr.mxu0 %v55
    %63 = vmatpush1.msra.mxu0 %v54
    %64 = vmatprep.subr.mxu0 0.0
    %65 = vmatpush1.msra.mxu0 0.0
    %66 = vmatprep.subr.mxu0 0.0
    %67 = vmatpush1.msra.mxu0 0.0
    %68 = vmatprep.subr.mxu0 0.0
    %69 = vmatpush1.msra.mxu0 0.0
    %70 = vmatprep.subr.mxu0 0.0
    %71 = vmatpush1.msra.mxu0 0.0
    %72 = vmatprep.subr.mxu0 0.0
    %73 = vmatpush1.msra.mxu0 0.0
    %74 = vmatprep.subr.mxu0 0.0
    %75 = vmatpush1.msra.mxu0 0.0
    %76 = vmatprep.subr.mxu0 0.0
    %77 = vmatpush1.msra.mxu0 0.0
    %78 = vmatprep.subr.mxu0 0.0
    %79 = vmatpush1.msra.mxu0 0.0
    %80 = vmatprep.subr.mxu0 0.0
    %81 = vmatpush1.msra.mxu0 0.0
    %82 = vmatprep.subr.mxu0 0.0
    %83 = vmatpush1.msra.mxu0 0.0
    %84 = vmatprep.subr.mxu0 0.0
    %85 = vmatpush1.msra.mxu0 0.0
    %86 = vmatprep.subr.mxu0 0.0
    %87 = vmatpush1.msra.mxu0 0.0
    %88 = vmatprep.subr.mxu0 0.0
    %89 = vmatpush1.msra.mxu0 0.0
    %90 = vmatprep.subr.mxu0 0.0
    %91 = vmatpush1.msra.mxu0 0.0
    %92 = vmatprep.subr.mxu0 0.0
    %93 = vmatpush1.msra.mxu0 0.0
    %94 = vmatprep.subr.mxu0 0.0
    %95 = vmatpush1.msra.mxu0 0.0
    %96 = vmatprep.subr.mxu0 0.0
    %97 = vmatpush1.msra.mxu0 0.0
    %98 = vmatprep.subr.mxu0 0.0
    %99 = vmatpush1.msra.mxu0 0.0
    %100 = vmatprep.subr.mxu0 0.0
    %101 = vmatpush1.msra.mxu0 0.0
    %102 = vmatprep.subr.mxu0 0.0
    %103 = vmatpush1.msra.mxu0 0.0
    %104 = vmatprep.subr.mxu0 0.0
    %105 = vmatpush1.msra.mxu0 0.0
    %106 = vmatprep.subr.mxu0 0.0
    %107 = vmatpush1.msra.mxu0 0.0
    %108 = vmatprep.subr.mxu0 0.0
    %109 = vmatpush1.msra.mxu0 0.0
    %110 = vmatprep.subr.mxu0 0.0
    %111 = vmatpush1.msra.mxu0 0.0
    %112 = vmatprep.subr.mxu0 0.0
    %113 = vmatpush1.msra.mxu0 0.0
    %114 = vmatprep.subr.mxu0 0.0
    %115 = vmatpush1.msra.mxu0 0.0
    %116 = vmatprep.subr.mxu0 0.0
    %117 = vmatpush1.msra.mxu0 0.0
    %118 = vmatprep.subr.mxu0 0.0
    %119 = vmatpush1.msra.mxu0 0.0
    %120 = vmatprep.subr.mxu0 0.0
    %121 = vmatpush1.msra.mxu0 0.0
    %122 = vmatprep.subr.mxu0 0.0
    %123 = vmatpush1.msra.mxu0 0.0
    %124 = vmatprep.mubr.f32.mxu0 0.0
    %125 = vmatmul.mubr.f32.gmra.mrb[0].mxu0 %v58
    %v126 = vpop.f32.mrb[0].mxu0
    %v127 = vadd.f32 0.0, %v126
    %v128 = vpop.f32.mrb[0].mxu0
    %v129 = vadd.f32 0.0, %v128
    %130 = vdwg.mxu0
    %s131 = scalar_lea.vmem %s0, 32
    %v132 = vld [vmem:[%s131] sm:$0xff]
    %v133 = vld [vmem:[%s131 + $0x8] sm:$0xff]
    %v134 = vld [vmem:[%s131 + $0x10] sm:$0xff]
    %v135 = vld [vmem:[%s131 + $0x18] sm:$0xff]
    %136 = vmatprep.subr.mxu0 %v133
    %137 = vmatpush1.msra.mxu0 %v132
    %138 = vmatprep.subr.mxu0 %v135
    %139 = vmatpush1.msra.mxu0 %v134
    %140 = vmatprep.subr.mxu0 0.0
    %141 = vmatpush1.msra.mxu0 0.0
    %142 = vmatprep.subr.mxu0 0.0
    %143 = vmatpush1.msra.mxu0 0.0
    %144 = vmatprep.subr.mxu0 0.0
    %145 = vmatpush1.msra.mxu0 0.0
    %146 = vmatprep.subr.mxu0 0.0
    %147 = vmatpush1.msra.mxu0 0.0
    %148 = vmatprep.subr.mxu0 0.0
    %149 = vmatpush1.msra.mxu0 0.0
    %150 = vmatprep.subr.mxu0 0.0
    %151 = vmatpush1.msra.mxu0 0.0
    %152 = vmatprep.subr.mxu0 0.0
    %153 = vmatpush1.msra.mxu0 0.0
    %154 = vmatprep.subr.mxu0 0.0
    %155 = vmatpush1.msra.mxu0 0.0
    %156 = vmatprep.subr.mxu0 0.0
    %157 = vmatpush1.msra.mxu0 0.0
    %158 = vmatprep.subr.mxu0 0.0
    %159 = vmatpush1.msra.mxu0 0.0
    %160 = vmatprep.subr.mxu0 0.0
    %161 = vmatpush1.msra.mxu0 0.0
    %162 = vmatprep.subr.mxu0 0.0
    %163 = vmatpush1.msra.mxu0 0.0
    %164 = vmatprep.subr.mxu0 0.0
    %165 = vmatpush1.msra.mxu0 0.0
    %166 = vmatprep.subr.mxu0 0.0
    %167 = vmatpush1.msra.mxu0 0.0
    %168 = vmatprep.subr.mxu0 0.0
    %169 = vmatpush1.msra.mxu0 0.0
    %170 = vmatprep.subr.mxu0 0.0
    %171 = vmatpush1.msra.mxu0 0.0
    %172 = vmatprep.subr.mxu0 0.0
    %173 = vmatpush1.msra.mxu0 0.0
    %174 = vmatprep.subr.mxu0 0.0
    %175 = vmatpush1.msra.mxu0 0.0
    %176 = vmatprep.subr.mxu0 0.0
    %177 = vmatpush1.msra.mxu0 0.0
    %178 = vmatprep.subr.mxu0 0.0
    %179 = vmatpush1.msra.mxu0 0.0
    %180 = vmatprep.subr.mxu0 0.0
    %181 = vmatpush1.msra.mxu0 0.0
    %182 = vmatprep.subr.mxu0 0.0
    %183 = vmatpush1.msra.mxu0 0.0
    %184 = vmatprep.subr.mxu0 0.0
    %185 = vmatpush1.msra.mxu0 0.0
    %186 = vmatprep.subr.mxu0 0.0
    %187 = vmatpush1.msra.mxu0 0.0
    %188 = vmatprep.subr.mxu0 0.0
    %189 = vmatpush1.msra.mxu0 0.0
    %190 = vmatprep.subr.mxu0 0.0
    %191 = vmatpush1.msra.mxu0 0.0
    %192 = vmatprep.subr.mxu0 0.0
    %193 = vmatpush1.msra.mxu0 0.0
    %194 = vmatprep.subr.mxu0 0.0
    %195 = vmatpush1.msra.mxu0 0.0
    %196 = vmatprep.subr.mxu0 0.0
    %197 = vmatpush1.msra.mxu0 0.0
    %198 = vmatprep.subr.mxu0 0.0
    %199 = vmatpush1.msra.mxu0 0.0
    %200 = vmatprep.mubr.f32.mxu0 0.0
    %201 = vmatmul.mubr.f32.gmra.mrb[0].mxu0 %v58
    %v202 = vpop.f32.mrb[0].mxu0
    %v203 = vadd.f32 0.0, %v202
    %v204 = vpop.f32.mrb[0].mxu0
    %v205 = vadd.f32 0.0, %v204
    %206 = vdwg.mxu0
    %v207 = vld [vmem:[%s4] sm:$0xf]
    %vm208 = vcmask 1043456
    %v209 = vsel %vm208, %v127, 0.0
    %v210 = vsel %vm208, %v129, 0.0
    %v211 = vadd.f32 %v209, %v210
    %212 = vadd.xlane.f32.xlu0 %v211
    %v213 = vpop.xlane.xlu0 %212
    %v214 = vmul.f32 %v127, %v127
    %v215 = vmul.f32 %v129, %v129
    %v216 = vsel %vm208, %v214, 0.0
    %v217 = vsel %vm208, %v215, 0.0
    %v218 = vadd.f32 %v216, %v217
    %219 = vadd.xlane.f32.xlu0 %v218
    %v220 = vpop.xlane.xlu0 %219
    %v221 = vsel %vm208, %v203, 0.0
    %v222 = vsel %vm208, %v205, 0.0
    %v223 = vadd.f32 %v221, %v222
    %224 = vadd.xlane.f32.xlu0 %v223
    %v225 = vpop.xlane.xlu0 %224
    %v226 = vadd.f32 %v213, %v225
    %v227 = vmul.f32 %v203, %v203
    %v228 = vmul.f32 %v205, %v205
    %v229 = vsel %vm208, %v227, 0.0
    %v230 = vsel %vm208, %v228, 0.0
    %v231 = vadd.f32 %v229, %v230
    %232 = vadd.xlane.f32.xlu0 %v231
    %v233 = vpop.xlane.xlu0 %232
    %v234 = vadd.f32 %v220, %v233
    %v235 = vmul.f32 %v226, 0.001953125
    %v236 = vmul.f32 %v234, 0.001953125
    %v237 = vmul.f32 %v235, %v235
    %v238 = vsub.f32 %v236, %v237
    %v239 = vadd.f32 %v238, 1e-05
    %v240 = vrsqrt.pop %v239
    %v241 = vmul.f32 %v207, %v240
    %v242 = vmul.f32 %v235, %v241
    %244 = vrot.lane.b32.xlu0 %v242, 1
    %v245 = vpop.permute.xlu0 %244
    %v247 = vsub.f32 %v207, %v245
    %249 = vset.pattern.permute.xlu0 0
    %250 = vperm.xlu0 %249, %v241
    %v251 = vpop.permute.xlu0 %250
    %v253 = vmul.f32 %v127, %v251
    %v254 = vmul.f32 %v129, %v251
    %256 = vset.pattern.permute.xlu0 1
    %257 = vperm.xlu0 %256, %v247
    %v258 = vpop.permute.xlu0 %257
    %v260 = vadd.f32 %v253, %v258
    %v261 = vadd.f32 %v254, %v258
    %v262 = vmul.f32 %v203, %v251
    %v263 = vmul.f32 %v205, %v251
    %v264 = vadd.f32 %v262, %v258
    %v265 = vadd.f32 %v263, %v258
    %v266 = vmax.f32 %v260, 0.0
    %v267 = vmax.f32 %v261, 0.0
    %v268 = vmax.f32 %v264, 0.0
    %v269 = vmax.f32 %v265, 0.0
    %270 = vrot.lane.b32.xlu0 %v266, 17
    %v271 = vpop.permute.xlu0 %270
    %272 = vrot.lane.b32.xlu0 %v267, 17
    %v273 = vpop.permute.xlu0 %272
    %v274 = vlaneseq
    %v275 = vand.u32 %v274, 127
    %vm276 = vcmp.lt.s32.totalorder %v275, 17
    %v277 = vsel %vm276, %v271, %v273
    %v278 = vsel %vm276, %v273, %v271
    %v279 = vlaneseq
    %v280 = vshrl.u32 %v279, 7
    %v281 = vsub.s32 0, %v280
    %v282 = vrot.slane %v48, %v281
    %v283 = vlaneseq
    %v284 = vshrl.u32 %v283, 7
    %v285 = vsub.s32 0, %v284
    %v286 = vrot.slane %v49, %v285
    %v287 = vmul.f32 %v278, %v282
    %v288 = vmul.f32 %v277, %v286
    %vm289 = vcmask 31744
    %v291 = vsel %vm289, %v37, 0
    %v294 = vsel %vm208, %v287, 0
    %v297 = vsel %vm208, %v288, 0
    %299 = vmatprep.subr.mxu0 %v297
    %300 = vmatpush1.msra.mxu0 %v294
    %301 = vmatprep.subr.mxu0 0.0
    %302 = vmatpush1.msra.mxu0 0.0
    %303 = vmatprep.subr.mxu0 0.0
    %304 = vmatpush1.msra.mxu0 0.0
    %305 = vmatprep.subr.mxu0 0.0
    %306 = vmatpush1.msra.mxu0 0.0
    %307 = vmatprep.subr.mxu0 0.0
    %308 = vmatpush1.msra.mxu0 0.0
    %309 = vmatprep.subr.mxu0 0.0
    %310 = vmatpush1.msra.mxu0 0.0
    %311 = vmatprep.subr.mxu0 0.0
    %312 = vmatpush1.msra.mxu0 0.0
    %313 = vmatprep.subr.mxu0 0.0
    %314 = vmatpush1.msra.mxu0 0.0
    %315 = vmatprep.subr.mxu0 0.0
    %316 = vmatpush1.msra.mxu0 0.0
    %317 = vmatprep.subr.mxu0 0.0
    %318 = vmatpush1.msra.mxu0 0.0
    %319 = vmatprep.subr.mxu0 0.0
    %320 = vmatpush1.msra.mxu0 0.0
    %321 = vmatprep.subr.mxu0 0.0
    %322 = vmatpush1.msra.mxu0 0.0
    %323 = vmatprep.subr.mxu0 0.0
    %324 = vmatpush1.msra.mxu0 0.0
    %325 = vmatprep.subr.mxu0 0.0
    %326 = vmatpush1.msra.mxu0 0.0
    %327 = vmatprep.subr.mxu0 0.0
    %328 = vmatpush1.msra.mxu0 0.0
    %329 = vmatprep.subr.mxu0 0.0
    %330 = vmatpush1.msra.mxu0 0.0
    %331 = vmatprep.subr.mxu0 0.0
    %332 = vmatpush1.msra.mxu0 0.0
    %333 = vmatprep.subr.mxu0 0.0
    %334 = vmatpush1.msra.mxu0 0.0
    %335 = vmatprep.subr.mxu0 0.0
    %336 = vmatpush1.msra.mxu0 0.0
    %337 = vmatprep.subr.mxu0 0.0
    %338 = vmatpush1.msra.mxu0 0.0
    %339 = vmatprep.subr.mxu0 0.0
    %340 = vmatpush1.msra.mxu0 0.0
    %341 = vmatprep.subr.mxu0 0.0
    %342 = vmatpush1.msra.mxu0 0.0
    %343 = vmatprep.subr.mxu0 0.0
    %344 = vmatpush1.msra.mxu0 0.0
    %345 = vmatprep.subr.mxu0 0.0
    %346 = vmatpush1.msra.mxu0 0.0
    %347 = vmatprep.subr.mxu0 0.0
    %348 = vmatpush1.msra.mxu0 0.0
    %349 = vmatprep.subr.mxu0 0.0
    %350 = vmatpush1.msra.mxu0 0.0
    %351 = vmatprep.subr.mxu0 0.0
    %352 = vmatpush1.msra.mxu0 0.0
    %353 = vmatprep.subr.mxu0 0.0
    %354 = vmatpush1.msra.mxu0 0.0
    %355 = vmatprep.subr.mxu0 0.0
    %356 = vmatpush1.msra.mxu0 0.0
    %357 = vmatprep.subr.mxu0 0.0
    %358 = vmatpush1.msra.mxu0 0.0
    %359 = vmatprep.subr.mxu0 0.0
    %360 = vmatpush1.msra.mxu0 0.0
    %361 = vmatprep.subr.mxu0 0.0
    %362 = vmatpush1.msra.mxu0 0.0
    %363 = vmatprep.mubr.f32.mxu0 0.0
    %364 = vmatmul.mubr.f32.gmra.mrb[0].mxu0 %v291
    %v365 = vpop.f32.mrb[0].mxu0
    %v366 = vadd.f32 0.0, %v365
    %v367 = vpop.f32.mrb[0].mxu0
    %v368 = vadd.f32 0.0, %v367
    %369 = vdwg.mxu0
    %v371 = vsel %vm289, %v41, 0
    %v374 = vsel %vm208, %v266, 0
    %v377 = vsel %vm208, %v267, 0
    %379 = vmatprep.subr.mxu0 %v377
    %380 = vmatpush1.msra.mxu0 %v374
    %381 = vmatprep.subr.mxu0 0.0
    %382 = vmatpush1.msra.mxu0 0.0
    %383 = vmatprep.subr.mxu0 0.0
    %384 = vmatpush1.msra.mxu0 0.0
    %385 = vmatprep.subr.mxu0 0.0
    %386 = vmatpush1.msra.mxu0 0.0
    %387 = vmatprep.subr.mxu0 0.0
    %388 = vmatpush1.msra.mxu0 0.0
    %389 = vmatprep.subr.mxu0 0.0
    %390 = vmatpush1.msra.mxu0 0.0
    %391 = vmatprep.subr.mxu0 0.0
    %392 = vmatpush1.msra.mxu0 0.0
    %393 = vmatprep.subr.mxu0 0.0
    %394 = vmatpush1.msra.mxu0 0.0
    %395 = vmatprep.subr.mxu0 0.0
    %396 = vmatpush1.msra.mxu0 0.0
    %397 = vmatprep.subr.mxu0 0.0
    %398 = vmatpush1.msra.mxu0 0.0
    %399 = vmatprep.subr.mxu0 0.0
    %400 = vmatpush1.msra.mxu0 0.0
    %401 = vmatprep.subr.mxu0 0.0
    %402 = vmatpush1.msra.mxu0 0.0
    %403 = vmatprep.subr.mxu0 0.0
    %404 = vmatpush1.msra.mxu0 0.0
    %405 = vmatprep.subr.mxu0 0.0
    %406 = vmatpush1.msra.mxu0 0.0
    %407 = vmatprep.subr.mxu0 0.0
    %408 = vmatpush1.msra.mxu0 0.0
    %409 = vmatprep.subr.mxu0 0.0
    %410 = vmatpush1.msra.mxu0 0.0
    %411 = vmatprep.subr.mxu0 0.0
    %412 = vmatpush1.msra.mxu0 0.0
    %413 = vmatprep.subr.mxu0 0.0
    %414 = vmatpush1.msra.mxu0 0.0
    %415 = vmatprep.subr.mxu0 0.0
    %416 = vmatpush1.msra.mxu0 0.0
    %417 = vmatprep.subr.mxu0 0.0
    %418 = vmatpush1.msra.mxu0 0.0
    %419 = vmatprep.subr.mxu0 0.0
    %420 = vmatpush1.msra.mxu0 0.0
    %421 = vmatprep.subr.mxu0 0.0
    %422 = vmatpush1.msra.mxu0 0.0
    %423 = vmatprep.subr.mxu0 0.0
    %424 = vmatpush1.msra.mxu0 0.0
    %425 = vmatprep.subr.mxu0 0.0
    %426 = vmatpush1.msra.mxu0 0.0
    %427 = vmatprep.subr.mxu0 0.0
    %428 = vmatpush1.msra.mxu0 0.0
    %429 = vmatprep.subr.mxu0 0.0
    %430 = vmatpush1.msra.mxu0 0.0
    %431 = vmatprep.subr.mxu0 0.0
    %432 = vmatpush1.msra.mxu0 0.0
    %433 = vmatprep.subr.mxu0 0.0
    %434 = vmatpush1.msra.mxu0 0.0
    %435 = vmatprep.subr.mxu0 0.0
    %436 = vmatpush1.msra.mxu0 0.0
    %437 = vmatprep.subr.mxu0 0.0
    %438 = vmatpush1.msra.mxu0 0.0
    %439 = vmatprep.subr.mxu0 0.0
    %440 = vmatpush1.msra.mxu0 0.0
    %441 = vmatprep.subr.mxu0 0.0
    %442 = vmatpush1.msra.mxu0 0.0
    %443 = vmatprep.mubr.f32.mxu0 0.0
    %444 = vmatmul.mubr.f32.gmra.mrb[0].mxu0 %v371
    %v445 = vpop.f32.mrb[0].mxu0
    %v446 = vadd.f32 %v366, %v445
    %v447 = vpop.f32.mrb[0].mxu0
    %v448 = vadd.f32 %v368, %v447
    %449 = vdwg.mxu0
    %450 = vrot.lane.b32.xlu0 %v266, 16
    %v451 = vpop.permute.xlu0 %450
    %452 = vrot.lane.b32.xlu0 %v267, 16
    %v453 = vpop.permute.xlu0 %452
    %vm454 = vcmp.lt.s32.totalorder %v275, 16
    %v455 = vsel %vm454, %v451, %v453
    %v456 = vsel %vm454, %v453, %v451
    %v457 = vlaneseq
    %v458 = vshrl.u32 %v457, 7
    %v459 = vsub.s32 1, %v458
    %v460 = vrot.slane %v48, %v459
    %v461 = vlaneseq
    %v462 = vshrl.u32 %v461, 7
    %v463 = vsub.s32 1, %v462
    %v464 = vrot.slane %v49, %v463
    %v465 = vmul.f32 %v456, %v460
    %v466 = vmul.f32 %v455, %v464
    %v468 = vsel %vm289, %v38, 0
    %v471 = vsel %vm208, %v465, 0
    %v474 = vsel %vm208, %v466, 0
    %476 = vmatprep.subr.mxu0 %v474
    %477 = vmatpush1.msra.mxu0 %v471
    %478 = vmatprep.subr.mxu0 0.0
    %479 = vmatpush1.msra.mxu0 0.0
    %480 = vmatprep.subr.mxu0 0.0
    %481 = vmatpush1.msra.mxu0 0.0
    %482 = vmatprep.subr.mxu0 0.0
    %483 = vmatpush1.msra.mxu0 0.0
    %484 = vmatprep.subr.mxu0 0.0
    %485 = vmatpush1.msra.mxu0 0.0
    %486 = vmatprep.subr.mxu0 0.0
    %487 = vmatpush1.msra.mxu0 0.0
    %488 = vmatprep.subr.mxu0 0.0
    %489 = vmatpush1.msra.mxu0 0.0
    %490 = vmatprep.subr.mxu0 0.0
    %491 = vmatpush1.msra.mxu0 0.0
    %492 = vmatprep.subr.mxu0 0.0
    %493 = vmatpush1.msra.mxu0 0.0
    %494 = vmatprep.subr.mxu0 0.0
    %495 = vmatpush1.msra.mxu0 0.0
    %496 = vmatprep.subr.mxu0 0.0
    %497 = vmatpush1.msra.mxu0 0.0
    %498 = vmatprep.subr.mxu0 0.0
    %499 = vmatpush1.msra.mxu0 0.0
    %500 = vmatprep.subr.mxu0 0.0
    %501 = vmatpush1.msra.mxu0 0.0
    %502 = vmatprep.subr.mxu0 0.0
    %503 = vmatpush1.msra.mxu0 0.0
    %504 = vmatprep.subr.mxu0 0.0
    %505 = vmatpush1.msra.mxu0 0.0
    %506 = vmatprep.subr.mxu0 0.0
    %507 = vmatpush1.msra.mxu0 0.0
    %508 = vmatprep.subr.mxu0 0.0
    %509 = vmatpush1.msra.mxu0 0.0
    %510 = vmatprep.subr.mxu0 0.0
    %511 = vmatpush1.msra.mxu0 0.0
    %512 = vmatprep.subr.mxu0 0.0
    %513 = vmatpush1.msra.mxu0 0.0
    %514 = vmatprep.subr.mxu0 0.0
    %515 = vmatpush1.msra.mxu0 0.0
    %516 = vmatprep.subr.mxu0 0.0
    %517 = vmatpush1.msra.mxu0 0.0
    %518 = vmatprep.subr.mxu0 0.0
    %519 = vmatpush1.msra.mxu0 0.0
    %520 = vmatprep.subr.mxu0 0.0
    %521 = vmatpush1.msra.mxu0 0.0
    %522 = vmatprep.subr.mxu0 0.0
    %523 = vmatpush1.msra.mxu0 0.0
    %524 = vmatprep.subr.mxu0 0.0
    %525 = vmatpush1.msra.mxu0 0.0
    %526 = vmatprep.subr.mxu0 0.0
    %527 = vmatpush1.msra.mxu0 0.0
    %528 = vmatprep.subr.mxu0 0.0
    %529 = vmatpush1.msra.mxu0 0.0
    %530 = vmatprep.subr.mxu0 0.0
    %531 = vmatpush1.msra.mxu0 0.0
    %532 = vmatprep.subr.mxu0 0.0
    %533 = vmatpush1.msra.mxu0 0.0
    %534 = vmatprep.subr.mxu0 0.0
    %535 = vmatpush1.msra.mxu0 0.0
    %536 = vmatprep.subr.mxu0 0.0
    %537 = vmatpush1.msra.mxu0 0.0
    %538 = vmatprep.subr.mxu0 0.0
    %539 = vmatpush1.msra.mxu0 0.0
    %540 = vmatprep.mubr.f32.mxu0 0.0
    %541 = vmatmul.mubr.f32.gmra.mrb[0].mxu0 %v468
    %v542 = vpop.f32.mrb[0].mxu0
    %v543 = vadd.f32 0.0, %v542
    %v544 = vpop.f32.mrb[0].mxu0
    %v545 = vadd.f32 0.0, %v544
    %546 = vdwg.mxu0
    %v547 = vadd.f32 %v446, %v543
    %v548 = vadd.f32 %v448, %v545
    %549 = vrot.lane.b32.xlu0 %v266, 15
    %v550 = vpop.permute.xlu0 %549
    %551 = vrot.lane.b32.xlu0 %v267, 15
    %v552 = vpop.permute.xlu0 %551
    %vm553 = vcmp.lt.s32.totalorder %v275, 15
    %v554 = vsel %vm553, %v550, %v552
    %v555 = vsel %vm553, %v552, %v550
    %v556 = vlaneseq
    %v557 = vshrl.u32 %v556, 7
    %v558 = vsub.s32 2, %v557
    %v559 = vrot.slane %v48, %v558
    %v560 = vlaneseq
    %v561 = vshrl.u32 %v560, 7
    %v562 = vsub.s32 2, %v561
    %v563 = vrot.slane %v49, %v562
    %v564 = vmul.f32 %v555, %v559
    %v565 = vmul.f32 %v554, %v563
    %v567 = vsel %vm289, %v39, 0
    %v570 = vsel %vm208, %v564, 0
    %v573 = vsel %vm208, %v565, 0
    %575 = vmatprep.subr.mxu0 %v573
    %576 = vmatpush1.msra.mxu0 %v570
    %577 = vmatprep.subr.mxu0 0.0
    %578 = vmatpush1.msra.mxu0 0.0
    %579 = vmatprep.subr.mxu0 0.0
    %580 = vmatpush1.msra.mxu0 0.0
    %581 = vmatprep.subr.mxu0 0.0
    %582 = vmatpush1.msra.mxu0 0.0
    %583 = vmatprep.subr.mxu0 0.0
    %584 = vmatpush1.msra.mxu0 0.0
    %585 = vmatprep.subr.mxu0 0.0
    %586 = vmatpush1.msra.mxu0 0.0
    %587 = vmatprep.subr.mxu0 0.0
    %588 = vmatpush1.msra.mxu0 0.0
    %589 = vmatprep.subr.mxu0 0.0
    %590 = vmatpush1.msra.mxu0 0.0
    %591 = vmatprep.subr.mxu0 0.0
    %592 = vmatpush1.msra.mxu0 0.0
    %593 = vmatprep.subr.mxu0 0.0
    %594 = vmatpush1.msra.mxu0 0.0
    %595 = vmatprep.subr.mxu0 0.0
    %596 = vmatpush1.msra.mxu0 0.0
    %597 = vmatprep.subr.mxu0 0.0
    %598 = vmatpush1.msra.mxu0 0.0
    %599 = vmatprep.subr.mxu0 0.0
    %600 = vmatpush1.msra.mxu0 0.0
    %601 = vmatprep.subr.mxu0 0.0
    %602 = vmatpush1.msra.mxu0 0.0
    %603 = vmatprep.subr.mxu0 0.0
    %604 = vmatpush1.msra.mxu0 0.0
    %605 = vmatprep.subr.mxu0 0.0
    %606 = vmatpush1.msra.mxu0 0.0
    %607 = vmatprep.subr.mxu0 0.0
    %608 = vmatpush1.msra.mxu0 0.0
    %609 = vmatprep.subr.mxu0 0.0
    %610 = vmatpush1.msra.mxu0 0.0
    %611 = vmatprep.subr.mxu0 0.0
    %612 = vmatpush1.msra.mxu0 0.0
    %613 = vmatprep.subr.mxu0 0.0
    %614 = vmatpush1.msra.mxu0 0.0
    %615 = vmatprep.subr.mxu0 0.0
    %616 = vmatpush1.msra.mxu0 0.0
    %617 = vmatprep.subr.mxu0 0.0
    %618 = vmatpush1.msra.mxu0 0.0
    %619 = vmatprep.subr.mxu0 0.0
    %620 = vmatpush1.msra.mxu0 0.0
    %621 = vmatprep.subr.mxu0 0.0
    %622 = vmatpush1.msra.mxu0 0.0
    %623 = vmatprep.subr.mxu0 0.0
    %624 = vmatpush1.msra.mxu0 0.0
    %625 = vmatprep.subr.mxu0 0.0
    %626 = vmatpush1.msra.mxu0 0.0
    %627 = vmatprep.subr.mxu0 0.0
    %628 = vmatpush1.msra.mxu0 0.0
    %629 = vmatprep.subr.mxu0 0.0
    %630 = vmatpush1.msra.mxu0 0.0
    %631 = vmatprep.subr.mxu0 0.0
    %632 = vmatpush1.msra.mxu0 0.0
    %633 = vmatprep.subr.mxu0 0.0
    %634 = vmatpush1.msra.mxu0 0.0
    %635 = vmatprep.subr.mxu0 0.0
    %636 = vmatpush1.msra.mxu0 0.0
    %637 = vmatprep.subr.mxu0 0.0
    %638 = vmatpush1.msra.mxu0 0.0
    %639 = vmatprep.mubr.f32.mxu0 0.0
    %640 = vmatmul.mubr.f32.gmra.mrb[0].mxu0 %v567
    %v641 = vpop.f32.mrb[0].mxu0
    %v642 = vadd.f32 0.0, %v641
    %v643 = vpop.f32.mrb[0].mxu0
    %v644 = vadd.f32 0.0, %v643
    %645 = vdwg.mxu0
    %v646 = vadd.f32 %v547, %v642
    %v647 = vadd.f32 %v548, %v644
    %648 = vrot.lane.b32.xlu0 %v266, 1
    %v649 = vpop.permute.xlu0 %648
    %650 = vrot.lane.b32.xlu0 %v267, 1
    %v651 = vpop.permute.xlu0 %650
    %vm652 = vcmp.lt.s32.totalorder %v275, 1
    %v653 = vsel %vm652, %v649, %v651
    %v654 = vsel %vm652, %v651, %v649
    %v655 = vlaneseq
    %v656 = vshrl.u32 %v655, 7
    %v657 = vsub.s32 3, %v656
    %v658 = vrot.slane %v48, %v657
    %v659 = vlaneseq
    %v660 = vshrl.u32 %v659, 7
    %v661 = vsub.s32 3, %v660
    %v662 = vrot.slane %v49, %v661
    %v663 = vmul.f32 %v654, %v658
    %v664 = vmul.f32 %v653, %v662
    %v666 = vsel %vm289, %v40, 0
    %v669 = vsel %vm208, %v663, 0
    %v672 = vsel %vm208, %v664, 0
    %674 = vmatprep.subr.mxu0 %v672
    %675 = vmatpush1.msra.mxu0 %v669
    %676 = vmatprep.subr.mxu0 0.0
    %677 = vmatpush1.msra.mxu0 0.0
    %678 = vmatprep.subr.mxu0 0.0
    %679 = vmatpush1.msra.mxu0 0.0
    %680 = vmatprep.subr.mxu0 0.0
    %681 = vmatpush1.msra.mxu0 0.0
    %682 = vmatprep.subr.mxu0 0.0
    %683 = vmatpush1.msra.mxu0 0.0
    %684 = vmatprep.subr.mxu0 0.0
    %685 = vmatpush1.msra.mxu0 0.0
    %686 = vmatprep.subr.mxu0 0.0
    %687 = vmatpush1.msra.mxu0 0.0
    %688 = vmatprep.subr.mxu0 0.0
    %689 = vmatpush1.msra.mxu0 0.0
    %690 = vmatprep.subr.mxu0 0.0
    %691 = vmatpush1.msra.mxu0 0.0
    %692 = vmatprep.subr.mxu0 0.0
    %693 = vmatpush1.msra.mxu0 0.0
    %694 = vmatprep.subr.mxu0 0.0
    %695 = vmatpush1.msra.mxu0 0.0
    %696 = vmatprep.subr.mxu0 0.0
    %697 = vmatpush1.msra.mxu0 0.0
    %698 = vmatprep.subr.mxu0 0.0
    %699 = vmatpush1.msra.mxu0 0.0
    %700 = vmatprep.subr.mxu0 0.0
    %701 = vmatpush1.msra.mxu0 0.0
    %702 = vmatprep.subr.mxu0 0.0
    %703 = vmatpush1.msra.mxu0 0.0
    %704 = vmatprep.subr.mxu0 0.0
    %705 = vmatpush1.msra.mxu0 0.0
    %706 = vmatprep.subr.mxu0 0.0
    %707 = vmatpush1.msra.mxu0 0.0
    %708 = vmatprep.subr.mxu0 0.0
    %709 = vmatpush1.msra.mxu0 0.0
    %710 = vmatprep.subr.mxu0 0.0
    %711 = vmatpush1.msra.mxu0 0.0
    %712 = vmatprep.subr.mxu0 0.0
    %713 = vmatpush1.msra.mxu0 0.0
    %714 = vmatprep.subr.mxu0 0.0
    %715 = vmatpush1.msra.mxu0 0.0
    %716 = vmatprep.subr.mxu0 0.0
    %717 = vmatpush1.msra.mxu0 0.0
    %718 = vmatprep.subr.mxu0 0.0
    %719 = vmatpush1.msra.mxu0 0.0
    %720 = vmatprep.subr.mxu0 0.0
    %721 = vmatpush1.msra.mxu0 0.0
    %722 = vmatprep.subr.mxu0 0.0
    %723 = vmatpush1.msra.mxu0 0.0
    %724 = vmatprep.subr.mxu0 0.0
    %725 = vmatpush1.msra.mxu0 0.0
    %726 = vmatprep.subr.mxu0 0.0
    %727 = vmatpush1.msra.mxu0 0.0
    %728 = vmatprep.subr.mxu0 0.0
    %729 = vmatpush1.msra.mxu0 0.0
    %730 = vmatprep.subr.mxu0 0.0
    %731 = vmatpush1.msra.mxu0 0.0
    %732 = vmatprep.subr.mxu0 0.0
    %733 = vmatpush1.msra.mxu0 0.0
    %734 = vmatprep.subr.mxu0 0.0
    %735 = vmatpush1.msra.mxu0 0.0
    %736 = vmatprep.subr.mxu0 0.0
    %737 = vmatpush1.msra.mxu0 0.0
    %738 = vmatprep.mubr.f32.mxu0 0.0
    %739 = vmatmul.mubr.f32.gmra.mrb[0].mxu0 %v666
    %v740 = vpop.f32.mrb[0].mxu0
    %v741 = vadd.f32 0.0, %v740
    %v742 = vpop.f32.mrb[0].mxu0
    %v743 = vadd.f32 0.0, %v742
    %744 = vdwg.mxu0
    %v745 = vadd.f32 %v646, %v741
    %v746 = vadd.f32 %v647, %v743
    %747 = vrot.lane.b32.xlu0 %v266, 127
    %v748 = vpop.permute.xlu0 %747
    %749 = vrot.lane.b32.xlu0 %v267, 127
    %v750 = vpop.permute.xlu0 %749
    %vm751 = vcmp.lt.s32.totalorder %v275, 127
    %v752 = vsel %vm751, %v748, %v750
    %v753 = vsel %vm751, %v750, %v748
    %v754 = vlaneseq
    %v755 = vshrl.u32 %v754, 7
    %v756 = vsub.s32 5, %v755
    %v757 = vrot.slane %v48, %v756
    %v758 = vlaneseq
    %v759 = vshrl.u32 %v758, 7
    %v760 = vsub.s32 5, %v759
    %v761 = vrot.slane %v49, %v760
    %v762 = vmul.f32 %v752, %v757
    %v763 = vmul.f32 %v753, %v761
    %v765 = vsel %vm289, %v42, 0
    %v768 = vsel %vm208, %v762, 0
    %v771 = vsel %vm208, %v763, 0
    %773 = vmatprep.subr.mxu0 %v771
    %774 = vmatpush1.msra.mxu0 %v768
    %775 = vmatprep.subr.mxu0 0.0
    %776 = vmatpush1.msra.mxu0 0.0
    %777 = vmatprep.subr.mxu0 0.0
    %778 = vmatpush1.msra.mxu0 0.0
    %779 = vmatprep.subr.mxu0 0.0
    %780 = vmatpush1.msra.mxu0 0.0
    %781 = vmatprep.subr.mxu0 0.0
    %782 = vmatpush1.msra.mxu0 0.0
    %783 = vmatprep.subr.mxu0 0.0
    %784 = vmatpush1.msra.mxu0 0.0
    %785 = vmatprep.subr.mxu0 0.0
    %786 = vmatpush1.msra.mxu0 0.0
    %787 = vmatprep.subr.mxu0 0.0
    %788 = vmatpush1.msra.mxu0 0.0
    %789 = vmatprep.subr.mxu0 0.0
    %790 = vmatpush1.msra.mxu0 0.0
    %791 = vmatprep.subr.mxu0 0.0
    %792 = vmatpush1.msra.mxu0 0.0
    %793 = vmatprep.subr.mxu0 0.0
    %794 = vmatpush1.msra.mxu0 0.0
    %795 = vmatprep.subr.mxu0 0.0
    %796 = vmatpush1.msra.mxu0 0.0
    %797 = vmatprep.subr.mxu0 0.0
    %798 = vmatpush1.msra.mxu0 0.0
    %799 = vmatprep.subr.mxu0 0.0
    %800 = vmatpush1.msra.mxu0 0.0
    %801 = vmatprep.subr.mxu0 0.0
    %802 = vmatpush1.msra.mxu0 0.0
    %803 = vmatprep.subr.mxu0 0.0
    %804 = vmatpush1.msra.mxu0 0.0
    %805 = vmatprep.subr.mxu0 0.0
    %806 = vmatpush1.msra.mxu0 0.0
    %807 = vmatprep.subr.mxu0 0.0
    %808 = vmatpush1.msra.mxu0 0.0
    %809 = vmatprep.subr.mxu0 0.0
    %810 = vmatpush1.msra.mxu0 0.0
    %811 = vmatprep.subr.mxu0 0.0
    %812 = vmatpush1.msra.mxu0 0.0
    %813 = vmatprep.subr.mxu0 0.0
    %814 = vmatpush1.msra.mxu0 0.0
    %815 = vmatprep.subr.mxu0 0.0
    %816 = vmatpush1.msra.mxu0 0.0
    %817 = vmatprep.subr.mxu0 0.0
    %818 = vmatpush1.msra.mxu0 0.0
    %819 = vmatprep.subr.mxu0 0.0
    %820 = vmatpush1.msra.mxu0 0.0
    %821 = vmatprep.subr.mxu0 0.0
    %822 = vmatpush1.msra.mxu0 0.0
    %823 = vmatprep.subr.mxu0 0.0
    %824 = vmatpush1.msra.mxu0 0.0
    %825 = vmatprep.subr.mxu0 0.0
    %826 = vmatpush1.msra.mxu0 0.0
    %827 = vmatprep.subr.mxu0 0.0
    %828 = vmatpush1.msra.mxu0 0.0
    %829 = vmatprep.subr.mxu0 0.0
    %830 = vmatpush1.msra.mxu0 0.0
    %831 = vmatprep.subr.mxu0 0.0
    %832 = vmatpush1.msra.mxu0 0.0
    %833 = vmatprep.subr.mxu0 0.0
    %834 = vmatpush1.msra.mxu0 0.0
    %835 = vmatprep.subr.mxu0 0.0
    %836 = vmatpush1.msra.mxu0 0.0
    %837 = vmatprep.mubr.f32.mxu0 0.0
    %838 = vmatmul.mubr.f32.gmra.mrb[0].mxu0 %v765
    %v839 = vpop.f32.mrb[0].mxu0
    %v840 = vadd.f32 0.0, %v839
    %v841 = vpop.f32.mrb[0].mxu0
    %v842 = vadd.f32 0.0, %v841
    %843 = vdwg.mxu0
    %v844 = vadd.f32 %v745, %v840
    %v845 = vadd.f32 %v746, %v842
    %846 = vrot.lane.b32.xlu0 %v266, 113
    %v847 = vpop.permute.xlu0 %846
    %848 = vrot.lane.b32.xlu0 %v267, 113
    %v849 = vpop.permute.xlu0 %848
    %vm850 = vcmp.lt.s32.totalorder %v275, 113
    %v851 = vsel %vm850, %v847, %v849
    %v852 = vsel %vm850, %v849, %v847
    %v853 = vlaneseq
    %v854 = vshrl.u32 %v853, 7
    %v855 = vsub.s32 6, %v854
    %v856 = vrot.slane %v48, %v855
    %v857 = vlaneseq
    %v858 = vshrl.u32 %v857, 7
    %v859 = vsub.s32 6, %v858
    %v860 = vrot.slane %v49, %v859
    %v861 = vmul.f32 %v851, %v856
    %v862 = vmul.f32 %v852, %v860
    %v864 = vsel %vm289, %v43, 0
    %v867 = vsel %vm208, %v861, 0
    %v870 = vsel %vm208, %v862, 0
    %872 = vmatprep.subr.mxu0 %v870
    %873 = vmatpush1.msra.mxu0 %v867
    %874 = vmatprep.subr.mxu0 0.0
    %875 = vmatpush1.msra.mxu0 0.0
    %876 = vmatprep.subr.mxu0 0.0
    %877 = vmatpush1.msra.mxu0 0.0
    %878 = vmatprep.subr.mxu0 0.0
    %879 = vmatpush1.msra.mxu0 0.0
    %880 = vmatprep.subr.mxu0 0.0
    %881 = vmatpush1.msra.mxu0 0.0
    %882 = vmatprep.subr.mxu0 0.0
    %883 = vmatpush1.msra.mxu0 0.0
    %884 = vmatprep.subr.mxu0 0.0
    %885 = vmatpush1.msra.mxu0 0.0
    %886 = vmatprep.subr.mxu0 0.0
    %887 = vmatpush1.msra.mxu0 0.0
    %888 = vmatprep.subr.mxu0 0.0
    %889 = vmatpush1.msra.mxu0 0.0
    %890 = vmatprep.subr.mxu0 0.0
    %891 = vmatpush1.msra.mxu0 0.0
    %892 = vmatprep.subr.mxu0 0.0
    %893 = vmatpush1.msra.mxu0 0.0
    %894 = vmatprep.subr.mxu0 0.0
    %895 = vmatpush1.msra.mxu0 0.0
    %896 = vmatprep.subr.mxu0 0.0
    %897 = vmatpush1.msra.mxu0 0.0
    %898 = vmatprep.subr.mxu0 0.0
    %899 = vmatpush1.msra.mxu0 0.0
    %900 = vmatprep.subr.mxu0 0.0
    %901 = vmatpush1.msra.mxu0 0.0
    %902 = vmatprep.subr.mxu0 0.0
    %903 = vmatpush1.msra.mxu0 0.0
    %904 = vmatprep.subr.mxu0 0.0
    %905 = vmatpush1.msra.mxu0 0.0
    %906 = vmatprep.subr.mxu0 0.0
    %907 = vmatpush1.msra.mxu0 0.0
    %908 = vmatprep.subr.mxu0 0.0
    %909 = vmatpush1.msra.mxu0 0.0
    %910 = vmatprep.subr.mxu0 0.0
    %911 = vmatpush1.msra.mxu0 0.0
    %912 = vmatprep.subr.mxu0 0.0
    %913 = vmatpush1.msra.mxu0 0.0
    %914 = vmatprep.subr.mxu0 0.0
    %915 = vmatpush1.msra.mxu0 0.0
    %916 = vmatprep.subr.mxu0 0.0
    %917 = vmatpush1.msra.mxu0 0.0
    %918 = vmatprep.subr.mxu0 0.0
    %919 = vmatpush1.msra.mxu0 0.0
    %920 = vmatprep.subr.mxu0 0.0
    %921 = vmatpush1.msra.mxu0 0.0
    %922 = vmatprep.subr.mxu0 0.0
    %923 = vmatpush1.msra.mxu0 0.0
    %924 = vmatprep.subr.mxu0 0.0
    %925 = vmatpush1.msra.mxu0 0.0
    %926 = vmatprep.subr.mxu0 0.0
    %927 = vmatpush1.msra.mxu0 0.0
    %928 = vmatprep.subr.mxu0 0.0
    %929 = vmatpush1.msra.mxu0 0.0
    %930 = vmatprep.subr.mxu0 0.0
    %931 = vmatpush1.msra.mxu0 0.0
    %932 = vmatprep.subr.mxu0 0.0
    %933 = vmatpush1.msra.mxu0 0.0
    %934 = vmatprep.subr.mxu0 0.0
    %935 = vmatpush1.msra.mxu0 0.0
    %936 = vmatprep.mubr.f32.mxu0 0.0
    %937 = vmatmul.mubr.f32.gmra.mrb[0].mxu0 %v864
    %v938 = vpop.f32.mrb[0].mxu0
    %v939 = vadd.f32 0.0, %v938
    %v940 = vpop.f32.mrb[0].mxu0
    %v941 = vadd.f32 0.0, %v940
    %942 = vdwg.mxu0
    %v943 = vadd.f32 %v844, %v939
    %v944 = vadd.f32 %v845, %v941
    %945 = vrot.lane.b32.xlu0 %v266, 112
    %v946 = vpop.permute.xlu0 %945
    %947 = vrot.lane.b32.xlu0 %v267, 112
    %v948 = vpop.permute.xlu0 %947
    %vm949 = vcmp.lt.s32.totalorder %v275, 112
    %v950 = vsel %vm949, %v946, %v948
    %v951 = vsel %vm949, %v948, %v946
    %v952 = vlaneseq
    %v953 = vshrl.u32 %v952, 7
    %v954 = vsub.s32 7, %v953
    %v955 = vrot.slane %v48, %v954
    %v956 = vlaneseq
    %v957 = vshrl.u32 %v956, 7
    %v958 = vsub.s32 7, %v957
    %v959 = vrot.slane %v49, %v958
    %v960 = vmul.f32 %v950, %v955
    %v961 = vmul.f32 %v951, %v959
    %v963 = vsel %vm289, %v44, 0
    %v966 = vsel %vm208, %v960, 0
    %v969 = vsel %vm208, %v961, 0
    %971 = vmatprep.subr.mxu0 %v969
    %972 = vmatpush1.msra.mxu0 %v966
    %973 = vmatprep.subr.mxu0 0.0
    %974 = vmatpush1.msra.mxu0 0.0
    %975 = vmatprep.subr.mxu0 0.0
    %976 = vmatpush1.msra.mxu0 0.0
    %977 = vmatprep.subr.mxu0 0.0
    %978 = vmatpush1.msra.mxu0 0.0
    %979 = vmatprep.subr.mxu0 0.0
    %980 = vmatpush1.msra.mxu0 0.0
    %981 = vmatprep.subr.mxu0 0.0
    %982 = vmatpush1.msra.mxu0 0.0
    %983 = vmatprep.subr.mxu0 0.0
    %984 = vmatpush1.msra.mxu0 0.0
    %985 = vmatprep.subr.mxu0 0.0
    %986 = vmatpush1.msra.mxu0 0.0
    %987 = vmatprep.subr.mxu0 0.0
    %988 = vmatpush1.msra.mxu0 0.0
    %989 = vmatprep.subr.mxu0 0.0
    %990 = vmatpush1.msra.mxu0 0.0
    %991 = vmatprep.subr.mxu0 0.0
    %992 = vmatpush1.msra.mxu0 0.0
    %993 = vmatprep.subr.mxu0 0.0
    %994 = vmatpush1.msra.mxu0 0.0
    %995 = vmatprep.subr.mxu0 0.0
    %996 = vmatpush1.msra.mxu0 0.0
    %997 = vmatprep.subr.mxu0 0.0
    %998 = vmatpush1.msra.mxu0 0.0
    %999 = vmatprep.subr.mxu0 0.0
    %1000 = vmatpush1.msra.mxu0 0.0
    %1001 = vmatprep.subr.mxu0 0.0
    %1002 = vmatpush1.msra.mxu0 0.0
    %1003 = vmatprep.subr.mxu0 0.0
    %1004 = vmatpush1.msra.mxu0 0.0
    %1005 = vmatprep.subr.mxu0 0.0
    %1006 = vmatpush1.msra.mxu0 0.0
    %1007 = vmatprep.subr.mxu0 0.0
    %1008 = vmatpush1.msra.mxu0 0.0
    %1009 = vmatprep.subr.mxu0 0.0
    %1010 = vmatpush1.msra.mxu0 0.0
    %1011 = vmatprep.subr.mxu0 0.0
    %1012 = vmatpush1.msra.mxu0 0.0
    %1013 = vmatprep.subr.mxu0 0.0
    %1014 = vmatpush1.msra.mxu0 0.0
    %1015 = vmatprep.subr.mxu0 0.0
    %1016 = vmatpush1.msra.mxu0 0.0
    %1017 = vmatprep.subr.mxu0 0.0
    %1018 = vmatpush1.msra.mxu0 0.0
    %1019 = vmatprep.subr.mxu0 0.0
    %1020 = vmatpush1.msra.mxu0 0.0
    %1021 = vmatprep.subr.mxu0 0.0
    %1022 = vmatpush1.msra.mxu0 0.0
    %1023 = vmatprep.subr.mxu0 0.0
    %1024 = vmatpush1.msra.mxu0 0.0
    %1025 = vmatprep.subr.mxu0 0.0
    %1026 = vmatpush1.msra.mxu0 0.0
    %1027 = vmatprep.subr.mxu0 0.0
    %1028 = vmatpush1.msra.mxu0 0.0
    %1029 = vmatprep.subr.mxu0 0.0
    %1030 = vmatpush1.msra.mxu0 0.0
    %1031 = vmatprep.subr.mxu0 0.0
    %1032 = vmatpush1.msra.mxu0 0.0
    %1033 = vmatprep.subr.mxu0 0.0
    %1034 = vmatpush1.msra.mxu0 0.0
    %1035 = vmatprep.mubr.f32.mxu0 0.0
    %1036 = vmatmul.mubr.f32.gmra.mrb[0].mxu0 %v963
    %v1037 = vpop.f32.mrb[0].mxu0
    %v1038 = vadd.f32 0.0, %v1037
    %v1039 = vpop.f32.mrb[0].mxu0
    %v1040 = vadd.f32 0.0, %v1039
    %1041 = vdwg.mxu0
    %v1042 = vadd.f32 %v943, %v1038
    %v1043 = vadd.f32 %v944, %v1040
    %1044 = vrot.lane.b32.xlu0 %v266, 111
    %v1045 = vpop.permute.xlu0 %1044
    %1046 = vrot.lane.b32.xlu0 %v267, 111
    %v1047 = vpop.permute.xlu0 %1046
    %vm1048 = vcmp.lt.s32.totalorder %v275, 111
    %v1049 = vsel %vm1048, %v1045, %v1047
    %v1050 = vsel %vm1048, %v1047, %v1045
    %v1051 = vlaneseq
    %v1052 = vshrl.u32 %v1051, 7
    %v1053 = vsub.s32 0, %v1052
    %v1054 = vrot.slane %v50, %v1053
    %v1055 = vlaneseq
    %v1056 = vshrl.u32 %v1055, 7
    %v1057 = vsub.s32 0, %v1056
    %v1058 = vrot.slane %v51, %v1057
    %v1059 = vmul.f32 %v1049, %v1054
    %v1060 = vmul.f32 %v1050, %v1058
    %v1062 = vsel %vm289, %v45, 0
    %v1065 = vsel %vm208, %v1059, 0
    %v1068 = vsel %vm208, %v1060, 0
    %1070 = vmatprep.subr.mxu0 %v1068
    %1071 = vmatpush1.msra.mxu0 %v1065
    %1072 = vmatprep.subr.mxu0 0.0
    %1073 = vmatpush1.msra.mxu0 0.0
    %1074 = vmatprep.subr.mxu0 0.0
    %1075 = vmatpush1.msra.mxu0 0.0
    %1076 = vmatprep.subr.mxu0 0.0
    %1077 = vmatpush1.msra.mxu0 0.0
    %1078 = vmatprep.subr.mxu0 0.0
    %1079 = vmatpush1.msra.mxu0 0.0
    %1080 = vmatprep.subr.mxu0 0.0
    %1081 = vmatpush1.msra.mxu0 0.0
    %1082 = vmatprep.subr.mxu0 0.0
    %1083 = vmatpush1.msra.mxu0 0.0
    %1084 = vmatprep.subr.mxu0 0.0
    %1085 = vmatpush1.msra.mxu0 0.0
    %1086 = vmatprep.subr.mxu0 0.0
    %1087 = vmatpush1.msra.mxu0 0.0
    %1088 = vmatprep.subr.mxu0 0.0
    %1089 = vmatpush1.msra.mxu0 0.0
    %1090 = vmatprep.subr.mxu0 0.0
    %1091 = vmatpush1.msra.mxu0 0.0
    %1092 = vmatprep.subr.mxu0 0.0
    %1093 = vmatpush1.msra.mxu0 0.0
    %1094 = vmatprep.subr.mxu0 0.0
    %1095 = vmatpush1.msra.mxu0 0.0
    %1096 = vmatprep.subr.mxu0 0.0
    %1097 = vmatpush1.msra.mxu0 0.0
    %1098 = vmatprep.subr.mxu0 0.0
    %1099 = vmatpush1.msra.mxu0 0.0
    %1100 = vmatprep.subr.mxu0 0.0
    %1101 = vmatpush1.msra.mxu0 0.0
    %1102 = vmatprep.subr.mxu0 0.0
    %1103 = vmatpush1.msra.mxu0 0.0
    %1104 = vmatprep.subr.mxu0 0.0
    %1105 = vmatpush1.msra.mxu0 0.0
    %1106 = vmatprep.subr.mxu0 0.0
    %1107 = vmatpush1.msra.mxu0 0.0
    %1108 = vmatprep.subr.mxu0 0.0
    %1109 = vmatpush1.msra.mxu0 0.0
    %1110 = vmatprep.subr.mxu0 0.0
    %1111 = vmatpush1.msra.mxu0 0.0
    %1112 = vmatprep.subr.mxu0 0.0
    %1113 = vmatpush1.msra.mxu0 0.0
    %1114 = vmatprep.subr.mxu0 0.0
    %1115 = vmatpush1.msra.mxu0 0.0
    %1116 = vmatprep.subr.mxu0 0.0
    %1117 = vmatpush1.msra.mxu0 0.0
    %1118 = vmatprep.subr.mxu0 0.0
    %1119 = vmatpush1.msra.mxu0 0.0
    %1120 = vmatprep.subr.mxu0 0.0
    %1121 = vmatpush1.msra.mxu0 0.0
    %1122 = vmatprep.subr.mxu0 0.0
    %1123 = vmatpush1.msra.mxu0 0.0
    %1124 = vmatprep.subr.mxu0 0.0
    %1125 = vmatpush1.msra.mxu0 0.0
    %1126 = vmatprep.subr.mxu0 0.0
    %1127 = vmatpush1.msra.mxu0 0.0
    %1128 = vmatprep.subr.mxu0 0.0
    %1129 = vmatpush1.msra.mxu0 0.0
    %1130 = vmatprep.subr.mxu0 0.0
    %1131 = vmatpush1.msra.mxu0 0.0
    %1132 = vmatprep.subr.mxu0 0.0
    %1133 = vmatpush1.msra.mxu0 0.0
    %1134 = vmatprep.mubr.f32.mxu0 0.0
    %1135 = vmatmul.mubr.f32.gmra.mrb[0].mxu0 %v1062
    %v1136 = vpop.f32.mrb[0].mxu0
    %v1137 = vadd.f32 0.0, %v1136
    %v1138 = vpop.f32.mrb[0].mxu0
    %v1139 = vadd.f32 0.0, %v1138
    %1140 = vdwg.mxu0
    %v1141 = vadd.f32 %v1042, %v1137
    %v1142 = vadd.f32 %v1043, %v1139
    %1143 = vrot.lane.b32.xlu0 %v268, 17
    %v1144 = vpop.permute.xlu0 %1143
    %1145 = vrot.lane.b32.xlu0 %v269, 17
    %v1146 = vpop.permute.xlu0 %1145
    %v1147 = vsel %vm276, %v1144, %v1146
    %v1148 = vsel %vm276, %v1146, %v1144
    %v1149 = vmul.f32 %v1148, %v282
    %v1150 = vmul.f32 %v1147, %v286
    %v1152 = vsel %vm208, %v1149, 0
    %v1155 = vsel %vm208, %v1150, 0
    %1157 = vmatprep.subr.mxu0 %v1155
    %1158 = vmatpush1.msra.mxu0 %v1152
    %1159 = vmatprep.subr.mxu0 0.0
    %1160 = vmatpush1.msra.mxu0 0.0
    %1161 = vmatprep.subr.mxu0 0.0
    %1162 = vmatpush1.msra.mxu0 0.0
    %1163 = vmatprep.subr.mxu0 0.0
    %1164 = vmatpush1.msra.mxu0 0.0
    %1165 = vmatprep.subr.mxu0 0.0
    %1166 = vmatpush1.msra.mxu0 0.0
    %1167 = vmatprep.subr.mxu0 0.0
    %1168 = vmatpush1.msra.mxu0 0.0
    %1169 = vmatprep.subr.mxu0 0.0
    %1170 = vmatpush1.msra.mxu0 0.0
    %1171 = vmatprep.subr.mxu0 0.0
    %1172 = vmatpush1.msra.mxu0 0.0
    %1173 = vmatprep.subr.mxu0 0.0
    %1174 = vmatpush1.msra.mxu0 0.0
    %1175 = vmatprep.subr.mxu0 0.0
    %1176 = vmatpush1.msra.mxu0 0.0
    %1177 = vmatprep.subr.mxu0 0.0
    %1178 = vmatpush1.msra.mxu0 0.0
    %1179 = vmatprep.subr.mxu0 0.0
    %1180 = vmatpush1.msra.mxu0 0.0
    %1181 = vmatprep.subr.mxu0 0.0
    %1182 = vmatpush1.msra.mxu0 0.0
    %1183 = vmatprep.subr.mxu0 0.0
    %1184 = vmatpush1.msra.mxu0 0.0
    %1185 = vmatprep.subr.mxu0 0.0
    %1186 = vmatpush1.msra.mxu0 0.0
    %1187 = vmatprep.subr.mxu0 0.0
    %1188 = vmatpush1.msra.mxu0 0.0
    %1189 = vmatprep.subr.mxu0 0.0
    %1190 = vmatpush1.msra.mxu0 0.0
    %1191 = vmatprep.subr.mxu0 0.0
    %1192 = vmatpush1.msra.mxu0 0.0
    %1193 = vmatprep.subr.mxu0 0.0
    %1194 = vmatpush1.msra.mxu0 0.0
    %1195 = vmatprep.subr.mxu0 0.0
    %1196 = vmatpush1.msra.mxu0 0.0
    %1197 = vmatprep.subr.mxu0 0.0
    %1198 = vmatpush1.msra.mxu0 0.0
    %1199 = vmatprep.subr.mxu0 0.0
    %1200 = vmatpush1.msra.mxu0 0.0
    %1201 = vmatprep.subr.mxu0 0.0
    %1202 = vmatpush1.msra.mxu0 0.0
    %1203 = vmatprep.subr.mxu0 0.0
    %1204 = vmatpush1.msra.mxu0 0.0
    %1205 = vmatprep.subr.mxu0 0.0
    %1206 = vmatpush1.msra.mxu0 0.0
    %1207 = vmatprep.subr.mxu0 0.0
    %1208 = vmatpush1.msra.mxu0 0.0
    %1209 = vmatprep.subr.mxu0 0.0
    %1210 = vmatpush1.msra.mxu0 0.0
    %1211 = vmatprep.subr.mxu0 0.0
    %1212 = vmatpush1.msra.mxu0 0.0
    %1213 = vmatprep.subr.mxu0 0.0
    %1214 = vmatpush1.msra.mxu0 0.0
    %1215 = vmatprep.subr.mxu0 0.0
    %1216 = vmatpush1.msra.mxu0 0.0
    %1217 = vmatprep.subr.mxu0 0.0
    %1218 = vmatpush1.msra.mxu0 0.0
    %1219 = vmatprep.subr.mxu0 0.0
    %1220 = vmatpush1.msra.mxu0 0.0
    %1221 = vmatprep.mubr.f32.mxu0 0.0
    %1222 = vmatmul.mubr.f32.gmra.mrb[0].mxu0 %v291
    %v1223 = vpop.f32.mrb[0].mxu0
    %v1224 = vadd.f32 0.0, %v1223
    %v1225 = vpop.f32.mrb[0].mxu0
    %v1226 = vadd.f32 0.0, %v1225
    %1227 = vdwg.mxu0
    %v1229 = vsel %vm208, %v268, 0
    %v1232 = vsel %vm208, %v269, 0
    %1234 = vmatprep.subr.mxu0 %v1232
    %1235 = vmatpush1.msra.mxu0 %v1229
    %1236 = vmatprep.subr.mxu0 0.0
    %1237 = vmatpush1.msra.mxu0 0.0
    %1238 = vmatprep.subr.mxu0 0.0
    %1239 = vmatpush1.msra.mxu0 0.0
    %1240 = vmatprep.subr.mxu0 0.0
    %1241 = vmatpush1.msra.mxu0 0.0
    %1242 = vmatprep.subr.mxu0 0.0
    %1243 = vmatpush1.msra.mxu0 0.0
    %1244 = vmatprep.subr.mxu0 0.0
    %1245 = vmatpush1.msra.mxu0 0.0
    %1246 = vmatprep.subr.mxu0 0.0
    %1247 = vmatpush1.msra.mxu0 0.0
    %1248 = vmatprep.subr.mxu0 0.0
    %1249 = vmatpush1.msra.mxu0 0.0
    %1250 = vmatprep.subr.mxu0 0.0
    %1251 = vmatpush1.msra.mxu0 0.0
    %1252 = vmatprep.subr.mxu0 0.0
    %1253 = vmatpush1.msra.mxu0 0.0
    %1254 = vmatprep.subr.mxu0 0.0
    %1255 = vmatpush1.msra.mxu0 0.0
    %1256 = vmatprep.subr.mxu0 0.0
    %1257 = vmatpush1.msra.mxu0 0.0
    %1258 = vmatprep.subr.mxu0 0.0
    %1259 = vmatpush1.msra.mxu0 0.0
    %1260 = vmatprep.subr.mxu0 0.0
    %1261 = vmatpush1.msra.mxu0 0.0
    %1262 = vmatprep.subr.mxu0 0.0
    %1263 = vmatpush1.msra.mxu0 0.0
    %1264 = vmatprep.subr.mxu0 0.0
    %1265 = vmatpush1.msra.mxu0 0.0
    %1266 = vmatprep.subr.mxu0 0.0
    %1267 = vmatpush1.msra.mxu0 0.0
    %1268 = vmatprep.subr.mxu0 0.0
    %1269 = vmatpush1.msra.mxu0 0.0
    %1270 = vmatprep.subr.mxu0 0.0
    %1271 = vmatpush1.msra.mxu0 0.0
    %1272 = vmatprep.subr.mxu0 0.0
    %1273 = vmatpush1.msra.mxu0 0.0
    %1274 = vmatprep.subr.mxu0 0.0
    %1275 = vmatpush1.msra.mxu0 0.0
    %1276 = vmatprep.subr.mxu0 0.0
    %1277 = vmatpush1.msra.mxu0 0.0
    %1278 = vmatprep.subr.mxu0 0.0
    %1279 = vmatpush1.msra.mxu0 0.0
    %1280 = vmatprep.subr.mxu0 0.0
    %1281 = vmatpush1.msra.mxu0 0.0
    %1282 = vmatprep.subr.mxu0 0.0
    %1283 = vmatpush1.msra.mxu0 0.0
    %1284 = vmatprep.subr.mxu0 0.0
    %1285 = vmatpush1.msra.mxu0 0.0
    %1286 = vmatprep.subr.mxu0 0.0
    %1287 = vmatpush1.msra.mxu0 0.0
    %1288 = vmatprep.subr.mxu0 0.0
    %1289 = vmatpush1.msra.mxu0 0.0
    %1290 = vmatprep.subr.mxu0 0.0
    %1291 = vmatpush1.msra.mxu0 0.0
    %1292 = vmatprep.subr.mxu0 0.0
    %1293 = vmatpush1.msra.mxu0 0.0
    %1294 = vmatprep.subr.mxu0 0.0
    %1295 = vmatpush1.msra.mxu0 0.0
    %1296 = vmatprep.subr.mxu0 0.0
    %1297 = vmatpush1.msra.mxu0 0.0
    %1298 = vmatprep.mubr.f32.mxu0 0.0
    %1299 = vmatmul.mubr.f32.gmra.mrb[0].mxu0 %v371
    %v1300 = vpop.f32.mrb[0].mxu0
    %v1301 = vadd.f32 %v1224, %v1300
    %v1302 = vpop.f32.mrb[0].mxu0
    %v1303 = vadd.f32 %v1226, %v1302
    %1304 = vdwg.mxu0
    %1305 = vrot.lane.b32.xlu0 %v268, 16
    %v1306 = vpop.permute.xlu0 %1305
    %1307 = vrot.lane.b32.xlu0 %v269, 16
    %v1308 = vpop.permute.xlu0 %1307
    %v1309 = vsel %vm454, %v1306, %v1308
    %v1310 = vsel %vm454, %v1308, %v1306
    %v1311 = vmul.f32 %v1310, %v460
    %v1312 = vmul.f32 %v1309, %v464
    %v1314 = vsel %vm208, %v1311, 0
    %v1317 = vsel %vm208, %v1312, 0
    %1319 = vmatprep.subr.mxu0 %v1317
    %1320 = vmatpush1.msra.mxu0 %v1314
    %1321 = vmatprep.subr.mxu0 0.0
    %1322 = vmatpush1.msra.mxu0 0.0
    %1323 = vmatprep.subr.mxu0 0.0
    %1324 = vmatpush1.msra.mxu0 0.0
    %1325 = vmatprep.subr.mxu0 0.0
    %1326 = vmatpush1.msra.mxu0 0.0
    %1327 = vmatprep.subr.mxu0 0.0
    %1328 = vmatpush1.msra.mxu0 0.0
    %1329 = vmatprep.subr.mxu0 0.0
    %1330 = vmatpush1.msra.mxu0 0.0
    %1331 = vmatprep.subr.mxu0 0.0
    %1332 = vmatpush1.msra.mxu0 0.0
    %1333 = vmatprep.subr.mxu0 0.0
    %1334 = vmatpush1.msra.mxu0 0.0
    %1335 = vmatprep.subr.mxu0 0.0
    %1336 = vmatpush1.msra.mxu0 0.0
    %1337 = vmatprep.subr.mxu0 0.0
    %1338 = vmatpush1.msra.mxu0 0.0
    %1339 = vmatprep.subr.mxu0 0.0
    %1340 = vmatpush1.msra.mxu0 0.0
    %1341 = vmatprep.subr.mxu0 0.0
    %1342 = vmatpush1.msra.mxu0 0.0
    %1343 = vmatprep.subr.mxu0 0.0
    %1344 = vmatpush1.msra.mxu0 0.0
    %1345 = vmatprep.subr.mxu0 0.0
    %1346 = vmatpush1.msra.mxu0 0.0
    %1347 = vmatprep.subr.mxu0 0.0
    %1348 = vmatpush1.msra.mxu0 0.0
    %1349 = vmatprep.subr.mxu0 0.0
    %1350 = vmatpush1.msra.mxu0 0.0
    %1351 = vmatprep.subr.mxu0 0.0
    %1352 = vmatpush1.msra.mxu0 0.0
    %1353 = vmatprep.subr.mxu0 0.0
    %1354 = vmatpush1.msra.mxu0 0.0
    %1355 = vmatprep.subr.mxu0 0.0
    %1356 = vmatpush1.msra.mxu0 0.0
    %1357 = vmatprep.subr.mxu0 0.0
    %1358 = vmatpush1.msra.mxu0 0.0
    %1359 = vmatprep.subr.mxu0 0.0
    %1360 = vmatpush1.msra.mxu0 0.0
    %1361 = vmatprep.subr.mxu0 0.0
    %1362 = vmatpush1.msra.mxu0 0.0
    %1363 = vmatprep.subr.mxu0 0.0
    %1364 = vmatpush1.msra.mxu0 0.0
    %1365 = vmatprep.subr.mxu0 0.0
    %1366 = vmatpush1.msra.mxu0 0.0
    %1367 = vmatprep.subr.mxu0 0.0
    %1368 = vmatpush1.msra.mxu0 0.0
    %1369 = vmatprep.subr.mxu0 0.0
    %1370 = vmatpush1.msra.mxu0 0.0
    %1371 = vmatprep.subr.mxu0 0.0
    %1372 = vmatpush1.msra.mxu0 0.0
    %1373 = vmatprep.subr.mxu0 0.0
    %1374 = vmatpush1.msra.mxu0 0.0
    %1375 = vmatprep.subr.mxu0 0.0
    %1376 = vmatpush1.msra.mxu0 0.0
    %1377 = vmatprep.subr.mxu0 0.0
    %1378 = vmatpush1.msra.mxu0 0.0
    %1379 = vmatprep.subr.mxu0 0.0
    %1380 = vmatpush1.msra.mxu0 0.0
    %1381 = vmatprep.subr.mxu0 0.0
    %1382 = vmatpush1.msra.mxu0 0.0
    %1383 = vmatprep.mubr.f32.mxu0 0.0
    %1384 = vmatmul.mubr.f32.gmra.mrb[0].mxu0 %v468
    %v1385 = vpop.f32.mrb[0].mxu0
    %v1386 = vadd.f32 0.0, %v1385
    %v1387 = vpop.f32.mrb[0].mxu0
    %v1388 = vadd.f32 0.0, %v1387
    %1389 = vdwg.mxu0
    %v1390 = vadd.f32 %v1301, %v1386
    %v1391 = vadd.f32 %v1303, %v1388
    %1392 = vrot.lane.b32.xlu0 %v268, 15
    %v1393 = vpop.permute.xlu0 %1392
    %1394 = vrot.lane.b32.xlu0 %v269, 15
    %v1395 = vpop.permute.xlu0 %1394
    %v1396 = vsel %vm553, %v1393, %v1395
    %v1397 = vsel %vm553, %v1395, %v1393
    %v1398 = vmul.f32 %v1397, %v559
    %v1399 = vmul.f32 %v1396, %v563
    %v1401 = vsel %vm208, %v1398, 0
    %v1404 = vsel %vm208, %v1399, 0
    %1406 = vmatprep.subr.mxu0 %v1404
    %1407 = vmatpush1.msra.mxu0 %v1401
    %1408 = vmatprep.subr.mxu0 0.0
    %1409 = vmatpush1.msra.mxu0 0.0
    %1410 = vmatprep.subr.mxu0 0.0
    %1411 = vmatpush1.msra.mxu0 0.0
    %1412 = vmatprep.subr.mxu0 0.0
    %1413 = vmatpush1.msra.mxu0 0.0
    %1414 = vmatprep.subr.mxu0 0.0
    %1415 = vmatpush1.msra.mxu0 0.0
    %1416 = vmatprep.subr.mxu0 0.0
    %1417 = vmatpush1.msra.mxu0 0.0
    %1418 = vmatprep.subr.mxu0 0.0
    %1419 = vmatpush1.msra.mxu0 0.0
    %1420 = vmatprep.subr.mxu0 0.0
    %1421 = vmatpush1.msra.mxu0 0.0
    %1422 = vmatprep.subr.mxu0 0.0
    %1423 = vmatpush1.msra.mxu0 0.0
    %1424 = vmatprep.subr.mxu0 0.0
    %1425 = vmatpush1.msra.mxu0 0.0
    %1426 = vmatprep.subr.mxu0 0.0
    %1427 = vmatpush1.msra.mxu0 0.0
    %1428 = vmatprep.subr.mxu0 0.0
    %1429 = vmatpush1.msra.mxu0 0.0
    %1430 = vmatprep.subr.mxu0 0.0
    %1431 = vmatpush1.msra.mxu0 0.0
    %1432 = vmatprep.subr.mxu0 0.0
    %1433 = vmatpush1.msra.mxu0 0.0
    %1434 = vmatprep.subr.mxu0 0.0
    %1435 = vmatpush1.msra.mxu0 0.0
    %1436 = vmatprep.subr.mxu0 0.0
    %1437 = vmatpush1.msra.mxu0 0.0
    %1438 = vmatprep.subr.mxu0 0.0
    %1439 = vmatpush1.msra.mxu0 0.0
    %1440 = vmatprep.subr.mxu0 0.0
    %1441 = vmatpush1.msra.mxu0 0.0
    %1442 = vmatprep.subr.mxu0 0.0
    %1443 = vmatpush1.msra.mxu0 0.0
    %1444 = vmatprep.subr.mxu0 0.0
    %1445 = vmatpush1.msra.mxu0 0.0
    %1446 = vmatprep.subr.mxu0 0.0
    %1447 = vmatpush1.msra.mxu0 0.0
    %1448 = vmatprep.subr.mxu0 0.0
    %1449 = vmatpush1.msra.mxu0 0.0
    %1450 = vmatprep.subr.mxu0 0.0
    %1451 = vmatpush1.msra.mxu0 0.0
    %1452 = vmatprep.subr.mxu0 0.0
    %1453 = vmatpush1.msra.mxu0 0.0
    %1454 = vmatprep.subr.mxu0 0.0
    %1455 = vmatpush1.msra.mxu0 0.0
    %1456 = vmatprep.subr.mxu0 0.0
    %1457 = vmatpush1.msra.mxu0 0.0
    %1458 = vmatprep.subr.mxu0 0.0
    %1459 = vmatpush1.msra.mxu0 0.0
    %1460 = vmatprep.subr.mxu0 0.0
    %1461 = vmatpush1.msra.mxu0 0.0
    %1462 = vmatprep.subr.mxu0 0.0
    %1463 = vmatpush1.msra.mxu0 0.0
    %1464 = vmatprep.subr.mxu0 0.0
    %1465 = vmatpush1.msra.mxu0 0.0
    %1466 = vmatprep.subr.mxu0 0.0
    %1467 = vmatpush1.msra.mxu0 0.0
    %1468 = vmatprep.subr.mxu0 0.0
    %1469 = vmatpush1.msra.mxu0 0.0
    %1470 = vmatprep.mubr.f32.mxu0 0.0
    %1471 = vmatmul.mubr.f32.gmra.mrb[0].mxu0 %v567
    %v1472 = vpop.f32.mrb[0].mxu0
    %v1473 = vadd.f32 0.0, %v1472
    %v1474 = vpop.f32.mrb[0].mxu0
    %v1475 = vadd.f32 0.0, %v1474
    %1476 = vdwg.mxu0
    %v1477 = vadd.f32 %v1390, %v1473
    %v1478 = vadd.f32 %v1391, %v1475
    %1479 = vrot.lane.b32.xlu0 %v268, 1
    %v1480 = vpop.permute.xlu0 %1479
    %1481 = vrot.lane.b32.xlu0 %v269, 1
    %v1482 = vpop.permute.xlu0 %1481
    %v1483 = vsel %vm652, %v1480, %v1482
    %v1484 = vsel %vm652, %v1482, %v1480
    %v1485 = vmul.f32 %v1484, %v658
    %v1486 = vmul.f32 %v1483, %v662
    %v1488 = vsel %vm208, %v1485, 0
    %v1491 = vsel %vm208, %v1486, 0
    %1493 = vmatprep.subr.mxu0 %v1491
    %1494 = vmatpush1.msra.mxu0 %v1488
    %1495 = vmatprep.subr.mxu0 0.0
    %1496 = vmatpush1.msra.mxu0 0.0
    %1497 = vmatprep.subr.mxu0 0.0
    %1498 = vmatpush1.msra.mxu0 0.0
    %1499 = vmatprep.subr.mxu0 0.0
    %1500 = vmatpush1.msra.mxu0 0.0
    %1501 = vmatprep.subr.mxu0 0.0
    %1502 = vmatpush1.msra.mxu0 0.0
    %1503 = vmatprep.subr.mxu0 0.0
    %1504 = vmatpush1.msra.mxu0 0.0
    %1505 = vmatprep.subr.mxu0 0.0
    %1506 = vmatpush1.msra.mxu0 0.0
    %1507 = vmatprep.subr.mxu0 0.0
    %1508 = vmatpush1.msra.mxu0 0.0
    %1509 = vmatprep.subr.mxu0 0.0
    %1510 = vmatpush1.msra.mxu0 0.0
    %1511 = vmatprep.subr.mxu0 0.0
    %1512 = vmatpush1.msra.mxu0 0.0
    %1513 = vmatprep.subr.mxu0 0.0
    %1514 = vmatpush1.msra.mxu0 0.0
    %1515 = vmatprep.subr.mxu0 0.0
    %1516 = vmatpush1.msra.mxu0 0.0
    %1517 = vmatprep.subr.mxu0 0.0
    %1518 = vmatpush1.msra.mxu0 0.0
    %1519 = vmatprep.subr.mxu0 0.0
    %1520 = vmatpush1.msra.mxu0 0.0
    %1521 = vmatprep.subr.mxu0 0.0
    %1522 = vmatpush1.msra.mxu0 0.0
    %1523 = vmatprep.subr.mxu0 0.0
    %1524 = vmatpush1.msra.mxu0 0.0
    %1525 = vmatprep.subr.mxu0 0.0
    %1526 = vmatpush1.msra.mxu0 0.0
    %1527 = vmatprep.subr.mxu0 0.0
    %1528 = vmatpush1.msra.mxu0 0.0
    %1529 = vmatprep.subr.mxu0 0.0
    %1530 = vmatpush1.msra.mxu0 0.0
    %1531 = vmatprep.subr.mxu0 0.0
    %1532 = vmatpush1.msra.mxu0 0.0
    %1533 = vmatprep.subr.mxu0 0.0
    %1534 = vmatpush1.msra.mxu0 0.0
    %1535 = vmatprep.subr.mxu0 0.0
    %1536 = vmatpush1.msra.mxu0 0.0
    %1537 = vmatprep.subr.mxu0 0.0
    %1538 = vmatpush1.msra.mxu0 0.0
    %1539 = vmatprep.subr.mxu0 0.0
    %1540 = vmatpush1.msra.mxu0 0.0
    %1541 = vmatprep.subr.mxu0 0.0
    %1542 = vmatpush1.msra.mxu0 0.0
    %1543 = vmatprep.subr.mxu0 0.0
    %1544 = vmatpush1.msra.mxu0 0.0
    %1545 = vmatprep.subr.mxu0 0.0
    %1546 = vmatpush1.msra.mxu0 0.0
    %1547 = vmatprep.subr.mxu0 0.0
    %1548 = vmatpush1.msra.mxu0 0.0
    %1549 = vmatprep.subr.mxu0 0.0
    %1550 = vmatpush1.msra.mxu0 0.0
    %1551 = vmatprep.subr.mxu0 0.0
    %1552 = vmatpush1.msra.mxu0 0.0
    %1553 = vmatprep.subr.mxu0 0.0
    %1554 = vmatpush1.msra.mxu0 0.0
    %1555 = vmatprep.subr.mxu0 0.0
    %1556 = vmatpush1.msra.mxu0 0.0
    %1557 = vmatprep.mubr.f32.mxu0 0.0
    %1558 = vmatmul.mubr.f32.gmra.mrb[0].mxu0 %v666
    %v1559 = vpop.f32.mrb[0].mxu0
    %v1560 = vadd.f32 0.0, %v1559
    %v1561 = vpop.f32.mrb[0].mxu0
    %v1562 = vadd.f32 0.0, %v1561
    %1563 = vdwg.mxu0
    %v1564 = vadd.f32 %v1477, %v1560
    %v1565 = vadd.f32 %v1478, %v1562
    %1566 = vrot.lane.b32.xlu0 %v268, 127
    %v1567 = vpop.permute.xlu0 %1566
    %1568 = vrot.lane.b32.xlu0 %v269, 127
    %v1569 = vpop.permute.xlu0 %1568
    %v1570 = vsel %vm751, %v1567, %v1569
    %v1571 = vsel %vm751, %v1569, %v1567
    %v1572 = vmul.f32 %v1570, %v757
    %v1573 = vmul.f32 %v1571, %v761
    %v1575 = vsel %vm208, %v1572, 0
    %v1578 = vsel %vm208, %v1573, 0
    %1580 = vmatprep.subr.mxu0 %v1578
    %1581 = vmatpush1.msra.mxu0 %v1575
    %1582 = vmatprep.subr.mxu0 0.0
    %1583 = vmatpush1.msra.mxu0 0.0
    %1584 = vmatprep.subr.mxu0 0.0
    %1585 = vmatpush1.msra.mxu0 0.0
    %1586 = vmatprep.subr.mxu0 0.0
    %1587 = vmatpush1.msra.mxu0 0.0
    %1588 = vmatprep.subr.mxu0 0.0
    %1589 = vmatpush1.msra.mxu0 0.0
    %1590 = vmatprep.subr.mxu0 0.0
    %1591 = vmatpush1.msra.mxu0 0.0
    %1592 = vmatprep.subr.mxu0 0.0
    %1593 = vmatpush1.msra.mxu0 0.0
    %1594 = vmatprep.subr.mxu0 0.0
    %1595 = vmatpush1.msra.mxu0 0.0
    %1596 = vmatprep.subr.mxu0 0.0
    %1597 = vmatpush1.msra.mxu0 0.0
    %1598 = vmatprep.subr.mxu0 0.0
    %1599 = vmatpush1.msra.mxu0 0.0
    %1600 = vmatprep.subr.mxu0 0.0
    %1601 = vmatpush1.msra.mxu0 0.0
    %1602 = vmatprep.subr.mxu0 0.0
    %1603 = vmatpush1.msra.mxu0 0.0
    %1604 = vmatprep.subr.mxu0 0.0
    %1605 = vmatpush1.msra.mxu0 0.0
    %1606 = vmatprep.subr.mxu0 0.0
    %1607 = vmatpush1.msra.mxu0 0.0
    %1608 = vmatprep.subr.mxu0 0.0
    %1609 = vmatpush1.msra.mxu0 0.0
    %1610 = vmatprep.subr.mxu0 0.0
    %1611 = vmatpush1.msra.mxu0 0.0
    %1612 = vmatprep.subr.mxu0 0.0
    %1613 = vmatpush1.msra.mxu0 0.0
    %1614 = vmatprep.subr.mxu0 0.0
    %1615 = vmatpush1.msra.mxu0 0.0
    %1616 = vmatprep.subr.mxu0 0.0
    %1617 = vmatpush1.msra.mxu0 0.0
    %1618 = vmatprep.subr.mxu0 0.0
    %1619 = vmatpush1.msra.mxu0 0.0
    %1620 = vmatprep.subr.mxu0 0.0
    %1621 = vmatpush1.msra.mxu0 0.0
    %1622 = vmatprep.subr.mxu0 0.0
    %1623 = vmatpush1.msra.mxu0 0.0
    %1624 = vmatprep.subr.mxu0 0.0
    %1625 = vmatpush1.msra.mxu0 0.0
    %1626 = vmatprep.subr.mxu0 0.0
    %1627 = vmatpush1.msra.mxu0 0.0
    %1628 = vmatprep.subr.mxu0 0.0
    %1629 = vmatpush1.msra.mxu0 0.0
    %1630 = vmatprep.subr.mxu0 0.0
    %1631 = vmatpush1.msra.mxu0 0.0
    %1632 = vmatprep.subr.mxu0 0.0
    %1633 = vmatpush1.msra.mxu0 0.0
    %1634 = vmatprep.subr.mxu0 0.0
    %1635 = vmatpush1.msra.mxu0 0.0
    %1636 = vmatprep.subr.mxu0 0.0
    %1637 = vmatpush1.msra.mxu0 0.0
    %1638 = vmatprep.subr.mxu0 0.0
    %1639 = vmatpush1.msra.mxu0 0.0
    %1640 = vmatprep.subr.mxu0 0.0
    %1641 = vmatpush1.msra.mxu0 0.0
    %1642 = vmatprep.subr.mxu0 0.0
    %1643 = vmatpush1.msra.mxu0 0.0
    %1644 = vmatprep.mubr.f32.mxu0 0.0
    %1645 = vmatmul.mubr.f32.gmra.mrb[0].mxu0 %v765
    %v1646 = vpop.f32.mrb[0].mxu0
    %v1647 = vadd.f32 0.0, %v1646
    %v1648 = vpop.f32.mrb[0].mxu0
    %v1649 = vadd.f32 0.0, %v1648
    %1650 = vdwg.mxu0
    %v1651 = vadd.f32 %v1564, %v1647
    %v1652 = vadd.f32 %v1565, %v1649
    %1653 = vrot.lane.b32.xlu0 %v268, 113
    %v1654 = vpop.permute.xlu0 %1653
    %1655 = vrot.lane.b32.xlu0 %v269, 113
    %v1656 = vpop.permute.xlu0 %1655
    %v1657 = vsel %vm850, %v1654, %v1656
    %v1658 = vsel %vm850, %v1656, %v1654
    %v1659 = vmul.f32 %v1657, %v856
    %v1660 = vmul.f32 %v1658, %v860
    %v1662 = vsel %vm208, %v1659, 0
    %v1665 = vsel %vm208, %v1660, 0
    %1667 = vmatprep.subr.mxu0 %v1665
    %1668 = vmatpush1.msra.mxu0 %v1662
    %1669 = vmatprep.subr.mxu0 0.0
    %1670 = vmatpush1.msra.mxu0 0.0
    %1671 = vmatprep.subr.mxu0 0.0
    %1672 = vmatpush1.msra.mxu0 0.0
    %1673 = vmatprep.subr.mxu0 0.0
    %1674 = vmatpush1.msra.mxu0 0.0
    %1675 = vmatprep.subr.mxu0 0.0
    %1676 = vmatpush1.msra.mxu0 0.0
    %1677 = vmatprep.subr.mxu0 0.0
    %1678 = vmatpush1.msra.mxu0 0.0
    %1679 = vmatprep.subr.mxu0 0.0
    %1680 = vmatpush1.msra.mxu0 0.0
    %1681 = vmatprep.subr.mxu0 0.0
    %1682 = vmatpush1.msra.mxu0 0.0
    %1683 = vmatprep.subr.mxu0 0.0
    %1684 = vmatpush1.msra.mxu0 0.0
    %1685 = vmatprep.subr.mxu0 0.0
    %1686 = vmatpush1.msra.mxu0 0.0
    %1687 = vmatprep.subr.mxu0 0.0
    %1688 = vmatpush1.msra.mxu0 0.0
    %1689 = vmatprep.subr.mxu0 0.0
    %1690 = vmatpush1.msra.mxu0 0.0
    %1691 = vmatprep.subr.mxu0 0.0
    %1692 = vmatpush1.msra.mxu0 0.0
    %1693 = vmatprep.subr.mxu0 0.0
    %1694 = vmatpush1.msra.mxu0 0.0
    %1695 = vmatprep.subr.mxu0 0.0
    %1696 = vmatpush1.msra.mxu0 0.0
    %1697 = vmatprep.subr.mxu0 0.0
    %1698 = vmatpush1.msra.mxu0 0.0
    %1699 = vmatprep.subr.mxu0 0.0
    %1700 = vmatpush1.msra.mxu0 0.0
    %1701 = vmatprep.subr.mxu0 0.0
    %1702 = vmatpush1.msra.mxu0 0.0
    %1703 = vmatprep.subr.mxu0 0.0
    %1704 = vmatpush1.msra.mxu0 0.0
    %1705 = vmatprep.subr.mxu0 0.0
    %1706 = vmatpush1.msra.mxu0 0.0
    %1707 = vmatprep.subr.mxu0 0.0
    %1708 = vmatpush1.msra.mxu0 0.0
    %1709 = vmatprep.subr.mxu0 0.0
    %1710 = vmatpush1.msra.mxu0 0.0
    %1711 = vmatprep.subr.mxu0 0.0
    %1712 = vmatpush1.msra.mxu0 0.0
    %1713 = vmatprep.subr.mxu0 0.0
    %1714 = vmatpush1.msra.mxu0 0.0
    %1715 = vmatprep.subr.mxu0 0.0
    %1716 = vmatpush1.msra.mxu0 0.0
    %1717 = vmatprep.subr.mxu0 0.0
    %1718 = vmatpush1.msra.mxu0 0.0
    %1719 = vmatprep.subr.mxu0 0.0
    %1720 = vmatpush1.msra.mxu0 0.0
    %1721 = vmatprep.subr.mxu0 0.0
    %1722 = vmatpush1.msra.mxu0 0.0
    %1723 = vmatprep.subr.mxu0 0.0
    %1724 = vmatpush1.msra.mxu0 0.0
    %1725 = vmatprep.subr.mxu0 0.0
    %1726 = vmatpush1.msra.mxu0 0.0
    %1727 = vmatprep.subr.mxu0 0.0
    %1728 = vmatpush1.msra.mxu0 0.0
    %1729 = vmatprep.subr.mxu0 0.0
    %1730 = vmatpush1.msra.mxu0 0.0
    %1731 = vmatprep.mubr.f32.mxu0 0.0
    %1732 = vmatmul.mubr.f32.gmra.mrb[0].mxu0 %v864
    %v1733 = vpop.f32.mrb[0].mxu0
    %v1734 = vadd.f32 0.0, %v1733
    %v1735 = vpop.f32.mrb[0].mxu0
    %v1736 = vadd.f32 0.0, %v1735
    %1737 = vdwg.mxu0
    %v1738 = vadd.f32 %v1651, %v1734
    %v1739 = vadd.f32 %v1652, %v1736
    %1740 = vrot.lane.b32.xlu0 %v268, 112
    %v1741 = vpop.permute.xlu0 %1740
    %1742 = vrot.lane.b32.xlu0 %v269, 112
    %v1743 = vpop.permute.xlu0 %1742
    %v1744 = vsel %vm949, %v1741, %v1743
    %v1745 = vsel %vm949, %v1743, %v1741
    %v1746 = vmul.f32 %v1744, %v955
    %v1747 = vmul.f32 %v1745, %v959
    %v1749 = vsel %vm208, %v1746, 0
    %v1752 = vsel %vm208, %v1747, 0
    %1754 = vmatprep.subr.mxu0 %v1752
    %1755 = vmatpush1.msra.mxu0 %v1749
    %1756 = vmatprep.subr.mxu0 0.0
    %1757 = vmatpush1.msra.mxu0 0.0
    %1758 = vmatprep.subr.mxu0 0.0
    %1759 = vmatpush1.msra.mxu0 0.0
    %1760 = vmatprep.subr.mxu0 0.0
    %1761 = vmatpush1.msra.mxu0 0.0
    %1762 = vmatprep.subr.mxu0 0.0
    %1763 = vmatpush1.msra.mxu0 0.0
    %1764 = vmatprep.subr.mxu0 0.0
    %1765 = vmatpush1.msra.mxu0 0.0
    %1766 = vmatprep.subr.mxu0 0.0
    %1767 = vmatpush1.msra.mxu0 0.0
    %1768 = vmatprep.subr.mxu0 0.0
    %1769 = vmatpush1.msra.mxu0 0.0
    %1770 = vmatprep.subr.mxu0 0.0
    %1771 = vmatpush1.msra.mxu0 0.0
    %1772 = vmatprep.subr.mxu0 0.0
    %1773 = vmatpush1.msra.mxu0 0.0
    %1774 = vmatprep.subr.mxu0 0.0
    %1775 = vmatpush1.msra.mxu0 0.0
    %1776 = vmatprep.subr.mxu0 0.0
    %1777 = vmatpush1.msra.mxu0 0.0
    %1778 = vmatprep.subr.mxu0 0.0
    %1779 = vmatpush1.msra.mxu0 0.0
    %1780 = vmatprep.subr.mxu0 0.0
    %1781 = vmatpush1.msra.mxu0 0.0
    %1782 = vmatprep.subr.mxu0 0.0
    %1783 = vmatpush1.msra.mxu0 0.0
    %1784 = vmatprep.subr.mxu0 0.0
    %1785 = vmatpush1.msra.mxu0 0.0
    %1786 = vmatprep.subr.mxu0 0.0
    %1787 = vmatpush1.msra.mxu0 0.0
    %1788 = vmatprep.subr.mxu0 0.0
    %1789 = vmatpush1.msra.mxu0 0.0
    %1790 = vmatprep.subr.mxu0 0.0
    %1791 = vmatpush1.msra.mxu0 0.0
    %1792 = vmatprep.subr.mxu0 0.0
    %1793 = vmatpush1.msra.mxu0 0.0
    %1794 = vmatprep.subr.mxu0 0.0
    %1795 = vmatpush1.msra.mxu0 0.0
    %1796 = vmatprep.subr.mxu0 0.0
    %1797 = vmatpush1.msra.mxu0 0.0
    %1798 = vmatprep.subr.mxu0 0.0
    %1799 = vmatpush1.msra.mxu0 0.0
    %1800 = vmatprep.subr.mxu0 0.0
    %1801 = vmatpush1.msra.mxu0 0.0
    %1802 = vmatprep.subr.mxu0 0.0
    %1803 = vmatpush1.msra.mxu0 0.0
    %1804 = vmatprep.subr.mxu0 0.0
    %1805 = vmatpush1.msra.mxu0 0.0
    %1806 = vmatprep.subr.mxu0 0.0
    %1807 = vmatpush1.msra.mxu0 0.0
    %1808 = vmatprep.subr.mxu0 0.0
    %1809 = vmatpush1.msra.mxu0 0.0
    %1810 = vmatprep.subr.mxu0 0.0
    %1811 = vmatpush1.msra.mxu0 0.0
    %1812 = vmatprep.subr.mxu0 0.0
    %1813 = vmatpush1.msra.mxu0 0.0
    %1814 = vmatprep.subr.mxu0 0.0
    %1815 = vmatpush1.msra.mxu0 0.0
    %1816 = vmatprep.subr.mxu0 0.0
    %1817 = vmatpush1.msra.mxu0 0.0
    %1818 = vmatprep.mubr.f32.mxu0 0.0
    %1819 = vmatmul.mubr.f32.gmra.mrb[0].mxu0 %v963
    %v1820 = vpop.f32.mrb[0].mxu0
    %v1821 = vadd.f32 0.0, %v1820
    %v1822 = vpop.f32.mrb[0].mxu0
    %v1823 = vadd.f32 0.0, %v1822
    %1824 = vdwg.mxu0
    %v1825 = vadd.f32 %v1738, %v1821
    %v1826 = vadd.f32 %v1739, %v1823
    %1827 = vrot.lane.b32.xlu0 %v268, 111
    %v1828 = vpop.permute.xlu0 %1827
    %1829 = vrot.lane.b32.xlu0 %v269, 111
    %v1830 = vpop.permute.xlu0 %1829
    %v1831 = vsel %vm1048, %v1828, %v1830
    %v1832 = vsel %vm1048, %v1830, %v1828
    %v1833 = vmul.f32 %v1831, %v1054
    %v1834 = vmul.f32 %v1832, %v1058
    %v1836 = vsel %vm208, %v1833, 0
    %v1839 = vsel %vm208, %v1834, 0
    %1841 = vmatprep.subr.mxu0 %v1839
    %1842 = vmatpush1.msra.mxu0 %v1836
    %1843 = vmatprep.subr.mxu0 0.0
    %1844 = vmatpush1.msra.mxu0 0.0
    %1845 = vmatprep.subr.mxu0 0.0
    %1846 = vmatpush1.msra.mxu0 0.0
    %1847 = vmatprep.subr.mxu0 0.0
    %1848 = vmatpush1.msra.mxu0 0.0
    %1849 = vmatprep.subr.mxu0 0.0
    %1850 = vmatpush1.msra.mxu0 0.0
    %1851 = vmatprep.subr.mxu0 0.0
    %1852 = vmatpush1.msra.mxu0 0.0
    %1853 = vmatprep.subr.mxu0 0.0
    %1854 = vmatpush1.msra.mxu0 0.0
    %1855 = vmatprep.subr.mxu0 0.0
    %1856 = vmatpush1.msra.mxu0 0.0
    %1857 = vmatprep.subr.mxu0 0.0
    %1858 = vmatpush1.msra.mxu0 0.0
    %1859 = vmatprep.subr.mxu0 0.0
    %1860 = vmatpush1.msra.mxu0 0.0
    %1861 = vmatprep.subr.mxu0 0.0
    %1862 = vmatpush1.msra.mxu0 0.0
    %1863 = vmatprep.subr.mxu0 0.0
    %1864 = vmatpush1.msra.mxu0 0.0
    %1865 = vmatprep.subr.mxu0 0.0
    %1866 = vmatpush1.msra.mxu0 0.0
    %1867 = vmatprep.subr.mxu0 0.0
    %1868 = vmatpush1.msra.mxu0 0.0
    %1869 = vmatprep.subr.mxu0 0.0
    %1870 = vmatpush1.msra.mxu0 0.0
    %1871 = vmatprep.subr.mxu0 0.0
    %1872 = vmatpush1.msra.mxu0 0.0
    %1873 = vmatprep.subr.mxu0 0.0
    %1874 = vmatpush1.msra.mxu0 0.0
    %1875 = vmatprep.subr.mxu0 0.0
    %1876 = vmatpush1.msra.mxu0 0.0
    %1877 = vmatprep.subr.mxu0 0.0
    %1878 = vmatpush1.msra.mxu0 0.0
    %1879 = vmatprep.subr.mxu0 0.0
    %1880 = vmatpush1.msra.mxu0 0.0
    %1881 = vmatprep.subr.mxu0 0.0
    %1882 = vmatpush1.msra.mxu0 0.0
    %1883 = vmatprep.subr.mxu0 0.0
    %1884 = vmatpush1.msra.mxu0 0.0
    %1885 = vmatprep.subr.mxu0 0.0
    %1886 = vmatpush1.msra.mxu0 0.0
    %1887 = vmatprep.subr.mxu0 0.0
    %1888 = vmatpush1.msra.mxu0 0.0
    %1889 = vmatprep.subr.mxu0 0.0
    %1890 = vmatpush1.msra.mxu0 0.0
    %1891 = vmatprep.subr.mxu0 0.0
    %1892 = vmatpush1.msra.mxu0 0.0
    %1893 = vmatprep.subr.mxu0 0.0
    %1894 = vmatpush1.msra.mxu0 0.0
    %1895 = vmatprep.subr.mxu0 0.0
    %1896 = vmatpush1.msra.mxu0 0.0
    %1897 = vmatprep.subr.mxu0 0.0
    %1898 = vmatpush1.msra.mxu0 0.0
    %1899 = vmatprep.subr.mxu0 0.0
    %1900 = vmatpush1.msra.mxu0 0.0
    %1901 = vmatprep.subr.mxu0 0.0
    %1902 = vmatpush1.msra.mxu0 0.0
    %1903 = vmatprep.subr.mxu0 0.0
    %1904 = vmatpush1.msra.mxu0 0.0
    %1905 = vmatprep.mubr.f32.mxu0 0.0
    %1906 = vmatmul.mubr.f32.gmra.mrb[0].mxu0 %v1062
    %v1907 = vpop.f32.mrb[0].mxu0
    %v1908 = vadd.f32 0.0, %v1907
    %v1909 = vpop.f32.mrb[0].mxu0
    %v1910 = vadd.f32 0.0, %v1909
    %1911 = vdwg.mxu0
    %v1912 = vadd.f32 %v1825, %v1908
    %v1913 = vadd.f32 %v1826, %v1910
    %v1914 = vsel %vm208, %v1141, 0.0
    %v1915 = vsel %vm208, %v1142, 0.0
    %v1916 = vadd.f32 %v1914, %v1915
    %1917 = vadd.xlane.f32.xlu0 %v1916
    %v1918 = vpop.xlane.xlu0 %1917
    %v1919 = vmul.f32 %v1141, %v1141
    %v1920 = vmul.f32 %v1142, %v1142
    %v1921 = vsel %vm208, %v1919, 0.0
    %v1922 = vsel %vm208, %v1920, 0.0
    %v1923 = vadd.f32 %v1921, %v1922
    %1924 = vadd.xlane.f32.xlu0 %v1923
    %v1925 = vpop.xlane.xlu0 %1924
    %v1926 = vsel %vm208, %v1912, 0.0
    %v1927 = vsel %vm208, %v1913, 0.0
    %v1928 = vadd.f32 %v1926, %v1927
    %1929 = vadd.xlane.f32.xlu0 %v1928
    %v1930 = vpop.xlane.xlu0 %1929
    %v1931 = vadd.f32 %v1918, %v1930
    %v1932 = vmul.f32 %v1912, %v1912
    %v1933 = vmul.f32 %v1913, %v1913
    %v1934 = vsel %vm208, %v1932, 0.0
    %v1935 = vsel %vm208, %v1933, 0.0
    %v1936 = vadd.f32 %v1934, %v1935
    %1937 = vadd.xlane.f32.xlu0 %v1936
    %v1938 = vpop.xlane.xlu0 %1937
    %v1939 = vadd.f32 %v1925, %v1938
    %v1940 = vmul.f32 %v1931, 0.001953125
    %v1941 = vmul.f32 %v1939, 0.001953125
    %v1942 = vmul.f32 %v1940, %v1940
    %v1943 = vsub.f32 %v1941, %v1942
    %v1944 = vadd.f32 %v1943, 1e-05
    %v1945 = vrsqrt.pop %v1944
    %v1946 = vmul.f32 %v207, %v1945
    %v1947 = vmul.f32 %v1940, %v1946
    %1949 = vrot.lane.b32.xlu0 %v1947, 1
    %v1950 = vpop.permute.xlu0 %1949
    %v1952 = vsub.f32 %v207, %v1950
    %1954 = vset.pattern.permute.xlu0 2
    %1955 = vperm.xlu0 %1954, %v1946
    %v1956 = vpop.permute.xlu0 %1955
    %v1958 = vmul.f32 %v1141, %v1956
    %v1959 = vmul.f32 %v1142, %v1956
    %1961 = vset.pattern.permute.xlu0 3
    %1962 = vperm.xlu0 %1961, %v1952
    %v1963 = vpop.permute.xlu0 %1962
    %v1965 = vadd.f32 %v1958, %v1963
    %v1966 = vadd.f32 %v1959, %v1963
    %v1967 = vmul.f32 %v1912, %v1956
    %v1968 = vmul.f32 %v1913, %v1956
    %v1969 = vadd.f32 %v1967, %v1963
    %v1970 = vadd.f32 %v1968, %v1963
    %v1971 = vmax.f32 %v1965, 0.0
    %v1972 = vmax.f32 %v1966, 0.0
    %v1973 = vmax.f32 %v1969, 0.0
    %v1974 = vmax.f32 %v1970, 0.0
    %v1976 = vsel %vm289, %v46, 0
    %v1979 = vsel %vm289, %v47, 0
    %v1982 = vsel %vm208, %v1971, 0
    %v1985 = vsel %vm208, %v1972, 0
    %1987 = vmatprep.subr.mxu0 %v1985
    %1988 = vmatpush1.msra.mxu0 %v1982
    %1989 = vmatprep.subr.mxu0 0.0
    %1990 = vmatpush1.msra.mxu0 0.0
    %1991 = vmatprep.subr.mxu0 0.0
    %1992 = vmatpush1.msra.mxu0 0.0
    %1993 = vmatprep.subr.mxu0 0.0
    %1994 = vmatpush1.msra.mxu0 0.0
    %1995 = vmatprep.subr.mxu0 0.0
    %1996 = vmatpush1.msra.mxu0 0.0
    %1997 = vmatprep.subr.mxu0 0.0
    %1998 = vmatpush1.msra.mxu0 0.0
    %1999 = vmatprep.subr.mxu0 0.0
    %2000 = vmatpush1.msra.mxu0 0.0
    %2001 = vmatprep.subr.mxu0 0.0
    %2002 = vmatpush1.msra.mxu0 0.0
    %2003 = vmatprep.subr.mxu0 0.0
    %2004 = vmatpush1.msra.mxu0 0.0
    %2005 = vmatprep.subr.mxu0 0.0
    %2006 = vmatpush1.msra.mxu0 0.0
    %2007 = vmatprep.subr.mxu0 0.0
    %2008 = vmatpush1.msra.mxu0 0.0
    %2009 = vmatprep.subr.mxu0 0.0
    %2010 = vmatpush1.msra.mxu0 0.0
    %2011 = vmatprep.subr.mxu0 0.0
    %2012 = vmatpush1.msra.mxu0 0.0
    %2013 = vmatprep.subr.mxu0 0.0
    %2014 = vmatpush1.msra.mxu0 0.0
    %2015 = vmatprep.subr.mxu0 0.0
    %2016 = vmatpush1.msra.mxu0 0.0
    %2017 = vmatprep.subr.mxu0 0.0
    %2018 = vmatpush1.msra.mxu0 0.0
    %2019 = vmatprep.subr.mxu0 0.0
    %2020 = vmatpush1.msra.mxu0 0.0
    %2021 = vmatprep.subr.mxu0 0.0
    %2022 = vmatpush1.msra.mxu0 0.0
    %2023 = vmatprep.subr.mxu0 0.0
    %2024 = vmatpush1.msra.mxu0 0.0
    %2025 = vmatprep.subr.mxu0 0.0
    %2026 = vmatpush1.msra.mxu0 0.0
    %2027 = vmatprep.subr.mxu0 0.0
    %2028 = vmatpush1.msra.mxu0 0.0
    %2029 = vmatprep.subr.mxu0 0.0
    %2030 = vmatpush1.msra.mxu0 0.0
    %2031 = vmatprep.subr.mxu0 0.0
    %2032 = vmatpush1.msra.mxu0 0.0
    %2033 = vmatprep.subr.mxu0 0.0
    %2034 = vmatpush1.msra.mxu0 0.0
    %2035 = vmatprep.subr.mxu0 0.0
    %2036 = vmatpush1.msra.mxu0 0.0
    %2037 = vmatprep.subr.mxu0 0.0
    %2038 = vmatpush1.msra.mxu0 0.0
    %2039 = vmatprep.subr.mxu0 0.0
    %2040 = vmatpush1.msra.mxu0 0.0
    %2041 = vmatprep.subr.mxu0 0.0
    %2042 = vmatpush1.msra.mxu0 0.0
    %2043 = vmatprep.subr.mxu0 0.0
    %2044 = vmatpush1.msra.mxu0 0.0
    %2045 = vmatprep.subr.mxu0 0.0
    %2046 = vmatpush1.msra.mxu0 0.0
    %2047 = vmatprep.subr.mxu0 0.0
    %2048 = vmatpush1.msra.mxu0 0.0
    %2049 = vmatprep.subr.mxu0 0.0
    %2050 = vmatpush1.msra.mxu0 0.0
    %2051 = vmatprep.mubr.f32.mxu0 0.0
    %2052 = vmatmul.mubr.f32.gmra.mrb[0].mxu0 %v1976
    %v2053 = vpop.f32.mrb[0].mxu0
    %v2054 = vadd.f32 0.0, %v2053
    %v2055 = vpop.f32.mrb[0].mxu0
    %v2056 = vadd.f32 0.0, %v2055
    %2057 = vmatprep.mubr.f32.mxu0 0.0
    %2058 = vmatmul.mubr.f32.gmra.mrb[0].mxu0 %v1979
    %v2059 = vpop.f32.mrb[0].mxu0
    %v2060 = vadd.f32 0.0, %v2059
    %v2061 = vpop.f32.mrb[0].mxu0
    %v2062 = vadd.f32 0.0, %v2061
    %2063 = vdwg.mxu0
    %v2065 = vsel %vm208, %v1973, 0
    %v2068 = vsel %vm208, %v1974, 0
    %2070 = vmatprep.subr.mxu0 %v2068
    %2071 = vmatpush1.msra.mxu0 %v2065
    %2072 = vmatprep.subr.mxu0 0.0
    %2073 = vmatpush1.msra.mxu0 0.0
    %2074 = vmatprep.subr.mxu0 0.0
    %2075 = vmatpush1.msra.mxu0 0.0
    %2076 = vmatprep.subr.mxu0 0.0
    %2077 = vmatpush1.msra.mxu0 0.0
    %2078 = vmatprep.subr.mxu0 0.0
    %2079 = vmatpush1.msra.mxu0 0.0
    %2080 = vmatprep.subr.mxu0 0.0
    %2081 = vmatpush1.msra.mxu0 0.0
    %2082 = vmatprep.subr.mxu0 0.0
    %2083 = vmatpush1.msra.mxu0 0.0
    %2084 = vmatprep.subr.mxu0 0.0
    %2085 = vmatpush1.msra.mxu0 0.0
    %2086 = vmatprep.subr.mxu0 0.0
    %2087 = vmatpush1.msra.mxu0 0.0
    %2088 = vmatprep.subr.mxu0 0.0
    %2089 = vmatpush1.msra.mxu0 0.0
    %2090 = vmatprep.subr.mxu0 0.0
    %2091 = vmatpush1.msra.mxu0 0.0
    %2092 = vmatprep.subr.mxu0 0.0
    %2093 = vmatpush1.msra.mxu0 0.0
    %2094 = vmatprep.subr.mxu0 0.0
    %2095 = vmatpush1.msra.mxu0 0.0
    %2096 = vmatprep.subr.mxu0 0.0
    %2097 = vmatpush1.msra.mxu0 0.0
    %2098 = vmatprep.subr.mxu0 0.0
    %2099 = vmatpush1.msra.mxu0 0.0
    %2100 = vmatprep.subr.mxu0 0.0
    %2101 = vmatpush1.msra.mxu0 0.0
    %2102 = vmatprep.subr.mxu0 0.0
    %2103 = vmatpush1.msra.mxu0 0.0
    %2104 = vmatprep.subr.mxu0 0.0
    %2105 = vmatpush1.msra.mxu0 0.0
    %2106 = vmatprep.subr.mxu0 0.0
    %2107 = vmatpush1.msra.mxu0 0.0
    %2108 = vmatprep.subr.mxu0 0.0
    %2109 = vmatpush1.msra.mxu0 0.0
    %2110 = vmatprep.subr.mxu0 0.0
    %2111 = vmatpush1.msra.mxu0 0.0
    %2112 = vmatprep.subr.mxu0 0.0
    %2113 = vmatpush1.msra.mxu0 0.0
    %2114 = vmatprep.subr.mxu0 0.0
    %2115 = vmatpush1.msra.mxu0 0.0
    %2116 = vmatprep.subr.mxu0 0.0
    %2117 = vmatpush1.msra.mxu0 0.0
    %2118 = vmatprep.subr.mxu0 0.0
    %2119 = vmatpush1.msra.mxu0 0.0
    %2120 = vmatprep.subr.mxu0 0.0
    %2121 = vmatpush1.msra.mxu0 0.0
    %2122 = vmatprep.subr.mxu0 0.0
    %2123 = vmatpush1.msra.mxu0 0.0
    %2124 = vmatprep.subr.mxu0 0.0
    %2125 = vmatpush1.msra.mxu0 0.0
    %2126 = vmatprep.subr.mxu0 0.0
    %2127 = vmatpush1.msra.mxu0 0.0
    %2128 = vmatprep.subr.mxu0 0.0
    %2129 = vmatpush1.msra.mxu0 0.0
    %2130 = vmatprep.subr.mxu0 0.0
    %2131 = vmatpush1.msra.mxu0 0.0
    %2132 = vmatprep.subr.mxu0 0.0
    %2133 = vmatpush1.msra.mxu0 0.0
    %2134 = vmatprep.mubr.f32.mxu0 0.0
    %2135 = vmatmul.mubr.f32.gmra.mrb[0].mxu0 %v1976
    %v2136 = vpop.f32.mrb[0].mxu0
    %v2137 = vadd.f32 0.0, %v2136
    %v2138 = vpop.f32.mrb[0].mxu0
    %v2139 = vadd.f32 0.0, %v2138
    %2140 = vmatprep.mubr.f32.mxu0 0.0
    %2141 = vmatmul.mubr.f32.gmra.mrb[0].mxu0 %v1979
    %v2142 = vpop.f32.mrb[0].mxu0
    %v2143 = vadd.f32 0.0, %v2142
    %v2144 = vpop.f32.mrb[0].mxu0
    %v2145 = vadd.f32 0.0, %v2144
    %2146 = vdwg.mxu0
    %v2147 = vld [vmem:[%s4] sm:$0xff]
    %v2148 = vld [vmem:[%s4 + $0x8] sm:$0xff]
    %v2149 = vadd.f32 %v2054, %v2056
    %2150 = vadd.xlane.f32.xlu0 %v2149
    %v2151 = vpop.xlane.xlu0 %2150
    %v2152 = vadd.f32 %v2060, %v2062
    %2153 = vadd.xlane.f32.xlu0 %v2152
    %v2154 = vpop.xlane.xlu0 %2153
    %v2155 = vmul.f32 %v2054, %v2054
    %v2156 = vmul.f32 %v2056, %v2056
    %v2157 = vmul.f32 %v2060, %v2060
    %v2158 = vmul.f32 %v2062, %v2062
    %v2159 = vadd.f32 %v2155, %v2156
    %2160 = vadd.xlane.f32.xlu0 %v2159
    %v2161 = vpop.xlane.xlu0 %2160
    %v2162 = vadd.f32 %v2157, %v2158
    %2163 = vadd.xlane.f32.xlu0 %v2162
    %v2164 = vpop.xlane.xlu0 %2163
    %v2165 = vadd.f32 %v2137, %v2139
    %2166 = vadd.xlane.f32.xlu0 %v2165
    %v2167 = vpop.xlane.xlu0 %2166
    %v2168 = vadd.f32 %v2143, %v2145
    %2169 = vadd.xlane.f32.xlu0 %v2168
    %v2170 = vpop.xlane.xlu0 %2169
    %v2171 = vadd.f32 %v2151, %v2167
    %v2172 = vadd.f32 %v2154, %v2170
    %v2173 = vmul.f32 %v2137, %v2137
    %v2174 = vmul.f32 %v2139, %v2139
    %v2175 = vmul.f32 %v2143, %v2143
    %v2176 = vmul.f32 %v2145, %v2145
    %v2177 = vadd.f32 %v2173, %v2174
    %2178 = vadd.xlane.f32.xlu0 %v2177
    %v2179 = vpop.xlane.xlu0 %2178
    %v2180 = vadd.f32 %v2175, %v2176
    %2181 = vadd.xlane.f32.xlu0 %v2180
    %v2182 = vpop.xlane.xlu0 %2181
    %v2183 = vadd.f32 %v2161, %v2179
    %v2184 = vadd.f32 %v2164, %v2182
    %v2185 = vmul.f32 %v2171, 0.001953125
    %v2186 = vmul.f32 %v2172, 0.001953125
    %v2187 = vmul.f32 %v2183, 0.001953125
    %v2188 = vmul.f32 %v2184, 0.001953125
    %v2189 = vmul.f32 %v2185, %v2185
    %v2190 = vmul.f32 %v2186, %v2186
    %v2191 = vsub.f32 %v2187, %v2189
    %v2192 = vsub.f32 %v2188, %v2190
    %v2193 = vadd.f32 %v2191, 1e-05
    %v2194 = vadd.f32 %v2192, 1e-05
    %v2195 = vrsqrt.pop %v2193
    %v2196 = vrsqrt.pop %v2194
    %v2197 = vmul.f32 %v2147, %v2195
    %v2198 = vmul.f32 %v2148, %v2196
    %v2199 = vmul.f32 %v2185, %v2197
    %v2200 = vmul.f32 %v2186, %v2198
    %2203 = vrot.lane.b32.xlu0 %v2199, 1
    %v2204 = vpop.permute.xlu0 %2203
    %2205 = vrot.lane.b32.xlu0 %v2200, 1
    %v2206 = vpop.permute.xlu0 %2205
    %v2209 = vsub.f32 %v2147, %v2204
    %v2210 = vsub.f32 %v2148, %v2206
    %2212 = vset.pattern.permute.xlu0 4
    %2213 = vperm.xlu0 %2212, %v2197
    %v2214 = vpop.permute.xlu0 %2213
    %2217 = vset.pattern.permute.xlu0 4
    %2218 = vperm.xlu0 %2217, %v2198
    %v2219 = vpop.permute.xlu0 %2218
    %v2221 = vmul.f32 %v2054, %v2214
    %v2222 = vmul.f32 %v2056, %v2214
    %v2223 = vmul.f32 %v2060, %v2219
    %v2224 = vmul.f32 %v2062, %v2219
    %2226 = vset.pattern.permute.xlu0 5
    %2227 = vperm.xlu0 %2226, %v2209
    %v2228 = vpop.permute.xlu0 %2227
    %2231 = vset.pattern.permute.xlu0 5
    %2232 = vperm.xlu0 %2231, %v2210
    %v2233 = vpop.permute.xlu0 %2232
    %v2235 = vadd.f32 %v2221, %v2228
    %v2236 = vadd.f32 %v2222, %v2228
    %v2237 = vadd.f32 %v2223, %v2233
    %v2238 = vadd.f32 %v2224, %v2233
    %v2239 = vmul.f32 %v2137, %v2214
    %v2240 = vmul.f32 %v2139, %v2214
    %v2241 = vmul.f32 %v2143, %v2219
    %v2242 = vmul.f32 %v2145, %v2219
    %v2243 = vadd.f32 %v2239, %v2228
    %v2244 = vadd.f32 %v2240, %v2228
    %v2245 = vadd.f32 %v2241, %v2233
    %v2246 = vadd.f32 %v2242, %v2233
    %v2247 = vadd.f32 %v2235, %v52
    %v2248 = vadd.f32 %v2236, %v53
    %v2249 = vadd.f32 %v2237, %v54
    %v2250 = vadd.f32 %v2238, %v55
    %v2251 = vmax.f32 %v2247, 0.0
    %v2252 = vmax.f32 %v2248, 0.0
    %v2253 = vmax.f32 %v2249, 0.0
    %v2254 = vmax.f32 %v2250, 0.0
    %2255 = vst [vmem:[#allocation5] sm:$0xff] %v2251
    %2256 = vst [vmem:[#allocation5 + $0x8] sm:$0xff] %v2252
    %2257 = vst [vmem:[#allocation5 + $0x10] sm:$0xff] %v2253
    %2258 = vst [vmem:[#allocation5 + $0x18] sm:$0xff] %v2254
    %v2259 = vld [vmem:[%s131] sm:$0xff]
    %v2260 = vld [vmem:[%s131 + $0x8] sm:$0xff]
    %v2261 = vld [vmem:[%s131 + $0x10] sm:$0xff]
    %v2262 = vld [vmem:[%s131 + $0x18] sm:$0xff]
    %v2263 = vadd.f32 %v2243, %v2259
    %v2264 = vadd.f32 %v2244, %v2260
    %v2265 = vadd.f32 %v2245, %v2261
    %v2266 = vadd.f32 %v2246, %v2262
    %v2267 = vmax.f32 %v2263, 0.0
    %v2268 = vmax.f32 %v2264, 0.0
    %v2269 = vmax.f32 %v2265, 0.0
    %v2270 = vmax.f32 %v2266, 0.0
    %s2271 = scalar_lea.vmem [#allocation5], 32
    %2272 = vst [vmem:[%s2271] sm:$0xff] %v2267
    %2273 = vst [vmem:[%s2271 + $0x8] sm:$0xff] %v2268
    %2274 = vst [vmem:[%s2271 + $0x10] sm:$0xff] %v2269
    %2275 = vst [vmem:[%s2271 + $0x18] sm:$0xff] %v2270
    // Predicated region
    $region30: #{tpu_custom_call.1} parent=1 // pred_check
      _
    $region31: #{tpu_custom_call.1} parent=1 // pred_check_branch
      %2277 = sbr.rel (0) target = $region33
    $region32: #{tpu_custom_call.1} parent=1 // pred_region
      %s2279 = ssub.s32 1024, 1024
      %2280 = vsyncadd [#allocation4], %s2279
      %s2281 = sshll.u32 [#allocation5], 4
      %s2282 = int_to_ptr.vmem [resolvable:$true] %s2281
      %2287 = dma.vmem_to_hbm [thread:$0]  %s2282, 1024, %s6, [#allocation4], 256, 256, 16
    $region33: #{tpu_custom_call.1} parent=1 // pred_fallthru
      _
    // Predicated region
    $region34: #{tpu_custom_call.1} parent=1 // pred_check
      _
    $region35: #{tpu_custom_call.1} parent=1 // pred_check_branch
      %2289 = sbr.rel (0) target = $region37
    $region36: #{tpu_custom_call.1} parent=1 // pred_region
      %2290 = dma.done [#allocation4], 1024
    $region37: #{tpu_custom_call.1} parent=1 // pred_fallthru
      _
    %2291 = vsyncpa [#allocation3], 1
    %2292 = vsyncpa [#allocation4], 1

</llo_original>
